<compile_context>
chip_gen: v6e
topology: v6e:2x2x1
jax: 0.10.0
libtpu: 0.0.40
codegen_flags: <defaults>
</compile_context>

<pallas_src>
import functools

import jax
import jax.numpy as jnp
from jax.experimental import pallas as pl
from jax.experimental.pallas import tpu as pltpu


_TAPS = tuple((di, dj) for di in (-1, 0, 1) for dj in (-1, 0, 1))


def _block_kernel(x_ref, masks_ref, g1_ref, be1_ref, g2_ref, be2_ref,
                  w1_ref, c1b_ref, w2_ref, c2b_ref, wsc_ref, scb_ref,
                  out_ref, *, W, bn_eps, mm_dtype):
    """Single-step kernel; activations resident in VMEM with layout (C, B*H*W)."""
    _, N = x_ref.shape
    inv_n = 1.0 / float(N)

    x = x_ref[...]                       # (C_in, N) f32
    masks = masks_ref[...]               # (9, N)    f32, exact 0/1

    def cond_bn_relu(h, gamma, beta):
        # Training-mode BN per channel over (B,H,W) == lane axis; one-pass stats.
        mean = jnp.sum(h, axis=1, keepdims=True) * inv_n            # (C,1)
        ex2 = jnp.sum(h * h, axis=1, keepdims=True) * inv_n         # (C,1)
        var = ex2 - mean * mean                                      # biased
        inv_std = jax.lax.rsqrt(var + bn_eps)                        # EUP
        h_hat = (h - mean) * inv_std
        return jnp.maximum(gamma * h_hat + beta, 0.0)                # CBN + ReLU

    def conv3x3(h, w_taps_ref, bias_ref):
        # 3x3 zero-padded conv as 9 masked lane rolls + MXU matmuls (f32 accum).
        w_taps = w_taps_ref[...]                                     # (9,Cout,Cin)
        c_out = w_taps.shape[1]
        acc = jnp.zeros((c_out, N), jnp.float32)
        for k, (di, dj) in enumerate(_TAPS):
            off = di * W + dj
            if off == 0:
                tap_in = h                        # center tap: mask is all ones
            else:
                shifted = pltpu.roll(h, shift=(-off) % N, axis=1)
                tap_in = shifted * masks[k:k + 1, :]   # zero the wrapped rows
            acc = acc + jnp.dot(w_taps[k], tap_in.astype(mm_dtype),
                                preferred_element_type=jnp.float32)
        return acc + bias_ref[...]                                   # +(Cout,1)

    # ---- residual branch ----
    h = cond_bn_relu(x, g1_ref[...], be1_ref[...])       # b1 + relu
    h = conv3x3(h, w1_ref, c1b_ref)                      # c1
    h = cond_bn_relu(h, g2_ref[...], be2_ref[...])       # b2 + relu
    res = conv3x3(h, w2_ref, c2b_ref)                    # c2

    # ---- shortcut branch: 1x1 conv == plain matmul ----
    sc = jnp.dot(wsc_ref[...], x.astype(mm_dtype),
                 preferred_element_type=jnp.float32) + scb_ref[...]

    out_ref[...] = (sc + res).astype(out_ref.dtype)


def block_forward(params, x, y, *, bn_eps=1e-5, mm_dtype=jnp.bfloat16):
    """Forward pass of `Block` (upsample=False, conditional BN) via one Pallas kernel."""
    f32 = jnp.float32
    B, c_in, H, W = x.shape
    h_ch = params['c1_w'].shape[0]
    out_ch = params['c2_w'].shape[0]
    N = B * H * W

    # --- layout: NCHW -> (C, B*H*W);  n = b*H*W + i*W + j ---
    x_t = jnp.transpose(x.astype(f32), (1, 0, 2, 3)).reshape(c_in, N)

    # --- precomputed boundary masks for the 9 taps (shared by both convs) ---
    n_idx = jnp.arange(N)
    i_idx = (n_idx // W) % H
    j_idx = n_idx % W
    masks = jnp.stack(
        [(((i_idx + di) >= 0) & ((i_idx + di) < H) &
          ((j_idx + dj) >= 0) & ((j_idx + dj) < W)).astype(f32)
         for (di, dj) in _TAPS], axis=0)                          # (9, N)

    # --- per-sample conditional gamma/beta broadcast to the kernel layout ---
    def per_sample(emb):
        v = emb[y].astype(f32)                                    # (B, C)
        return jnp.repeat(v.T, H * W, axis=1)                     # (C, N)

    g1, be1 = per_sample(params['emb1_w']), per_sample(params['emb1_b'])
    g2, be2 = per_sample(params['emb2_w']), per_sample(params['emb2_b'])

    # --- conv weights as per-tap (C_out, C_in) MXU operands (bf16 by default) ---
    w1_taps = jnp.stack([params['c1_w'][:, :, di + 1, dj + 1] for (di, dj) in _TAPS]
                        ).astype(mm_dtype)                        # (9, h_ch, c_in)
    w2_taps = jnp.stack([params['c2_w'][:, :, di + 1, dj + 1] for (di, dj) in _TAPS]
                        ).astype(mm_dtype)                        # (9, out_ch, h_ch)
    w_sc = params['c_sc_w'][:, :, 0, 0].astype(mm_dtype)          # (out_ch, c_in)
    c1b = params['c1_b'].reshape(h_ch, 1).astype(f32)
    c2b = params['c2_b'].reshape(out_ch, 1).astype(f32)
    scb = params['c_sc_b'].reshape(out_ch, 1).astype(f32)

    operands = (x_t, masks, g1, be1, g2, be2, w1_taps, c1b, w2_taps, c2b, w_sc, scb)

    mm_flops = 2 * N * (9 * c_in * h_ch + 9 * h_ch * out_ch + c_in * out_ch)
    vpu_flops = N * (14 * (c_in + h_ch) + 9 * (c_in + h_ch) + 2 * out_ch)
    bytes_accessed = int(sum(int(a.size) * a.dtype.itemsize for a in operands)
                         + out_ch * N * 4)

    kernel = functools.partial(_block_kernel, W=W, bn_eps=bn_eps, mm_dtype=mm_dtype)
    vmem = pl.BlockSpec(memory_space=pltpu.MemorySpace.VMEM)

    out_flat = pl.pallas_call(
        kernel,
        out_shape=jax.ShapeDtypeStruct((out_ch, N), f32),
        in_specs=[vmem] * len(operands),
        out_specs=vmem,
        cost_estimate=pl.CostEstimate(flops=mm_flops + vpu_flops,
                                      transcendentals=c_in + h_ch,
                                      bytes_accessed=bytes_accessed),
    )(*operands)

    # (out_ch, B*H*W) -> NCHW
    return jnp.transpose(out_flat.reshape(out_ch, B, H, W), (1, 0, 2, 3))


def reference_forward(params, x, y, *, bn_eps=1e-5):
    """Pure-JAX f32 (HIGHEST precision) mirror of Block.forward in training mode."""
    f32 = jnp.float32
    x = x.astype(f32)

    def cbn_relu(h, emb_w, emb_b):
        mean = h.mean(axis=(0, 2, 3), keepdims=True)
        var = h.var(axis=(0, 2, 3), keepdims=True)                # biased
        h_hat = (h - mean) / jnp.sqrt(var + bn_eps)
        g = emb_w[y].astype(f32)[:, :, None, None]
        b = emb_b[y].astype(f32)[:, :, None, None]
        return jnp.maximum(g * h_hat + b, 0.0)

    def conv(h, w, b, pad):
        out = jax.lax.conv_general_dilated(
            h, w.astype(f32), window_strides=(1, 1), padding=pad,
            dimension_numbers=('NCHW', 'OIHW', 'NCHW'),
            precision=jax.lax.Precision.HIGHEST)
        return out + b.astype(f32)[None, :, None, None]

    h = cbn_relu(x, params['emb1_w'], params['emb1_b'])
    h = conv(h, params['c1_w'], params['c1_b'], ((1, 1), (1, 1)))
    h = cbn_relu(h, params['emb2_w'], params['emb2_b'])
    res = conv(h, params['c2_w'], params['c2_b'], ((1, 1), (1, 1)))
    sc = conv(x, params['c_sc_w'], params['c_sc_b'], ((0, 0), (0, 0)))
    return sc + res


def init_params(key, *, in_ch=4, out_ch=8, h_ch=None, num_classes=10):
    """Deterministic parameters matching the module's tensor shapes."""
    if h_ch is None:
        h_ch = out_ch
    ks = jax.random.split(key, 3)

    def conv_init(k, co, ci, kh, kw):
        fan_in = ci * kh * kw
        bound = 1.0 / (fan_in ** 0.5)             # PyTorch default conv init scale
        kw_, kb_ = jax.random.split(k)
        w = jax.random.uniform(kw_, (co, ci, kh, kw), jnp.float32, -bound, bound)
        b = jax.random.uniform(kb_, (co,), jnp.float32, -bound, bound)
        return w, b

    c1_w, c1_b = conv_init(ks[0], h_ch, in_ch, 3, 3)
    c2_w, c2_b = conv_init(ks[1], out_ch, h_ch, 3, 3)
    c_sc_w, c_sc_b = conv_init(ks[2], out_ch, in_ch, 1, 1)
    # CategoricalConditionalBatchNorm2d._initialize(): weights -> ones, biases -> zeros
    return dict(
        c1_w=c1_w, c1_b=c1_b, c2_w=c2_w, c2_b=c2_b,
        c_sc_w=c_sc_w, c_sc_b=c_sc_b,
        emb1_w=jnp.ones((num_classes, in_ch), jnp.float32),
        emb1_b=jnp.zeros((num_classes, in_ch), jnp.float32),
        emb2_w=jnp.ones((num_classes, h_ch), jnp.float32),
        emb2_b=jnp.zeros((num_classes, h_ch), jnp.float32),
    )


if __name__ == "__main__":
    B, IN_CH, OUT_CH, H, W = 2, 4, 8, 16, 16
    NUM_CLASSES = 10

    key = jax.random.PRNGKey(0)
    kp, kx, ky = jax.random.split(key, 3)
    params = init_params(kp, in_ch=IN_CH, out_ch=OUT_CH, num_classes=NUM_CLASSES)
    x = jax.random.normal(kx, (B, IN_CH, H, W), dtype=jnp.float32)
    y = jax.random.randint(ky, (B,), 0, NUM_CLASSES, dtype=jnp.int32)

    ref = reference_forward(params, x, y)

    # Primary (performance) configuration: bf16 MXU operands, f32 accumulation
    # and f32 element-wise / BN math.  bf16 operand rounding through two stacked
    # convs stays well inside the tolerance below.
    out_bf16 = jax.block_until_ready(
        block_forward(params, x, y, mm_dtype=jnp.bfloat16))
    assert out_bf16.shape == (B, OUT_CH, H, W)
    assert bool(jnp.all(jnp.isfinite(out_bf16)))
    assert bool(jnp.allclose(out_bf16, ref, rtol=3e-2, atol=3e-2)), \
        f"bf16-MXU max abs err {float(jnp.max(jnp.abs(out_bf16 - ref)))}"

    # f32 MXU operands (accuracy-critical mode / v5e-style "keep VPU math f32").
    out_f32 = jax.block_until_ready(
        block_forward(params, x, y, mm_dtype=jnp.float32))
    assert bool(jnp.all(jnp.isfinite(out_f32)))
    assert bool(jnp.allclose(out_f32, ref, rtol=2e-2, atol=2e-2)), \
        f"f32-MXU max abs err {float(jnp.max(jnp.abs(out_f32 - ref)))}"

    print("KERNEL_OK")
</pallas_src>

<mosaic_0001>
module attributes {stable_mosaic.version = 11 : i64} {
  func.func @_block_kernel(%arg0: memref<4x512xf32, #tpu.memory_space<vmem>>, %arg1: memref<9x512xf32, #tpu.memory_space<vmem>>, %arg2: memref<4x512xf32, #tpu.memory_space<vmem>>, %arg3: memref<4x512xf32, #tpu.memory_space<vmem>>, %arg4: memref<8x512xf32, #tpu.memory_space<vmem>>, %arg5: memref<8x512xf32, #tpu.memory_space<vmem>>, %arg6: memref<9x8x4xbf16, #tpu.memory_space<vmem>>, %arg7: memref<8x1xf32, #tpu.memory_space<vmem>>, %arg8: memref<9x8x8xbf16, #tpu.memory_space<vmem>>, %arg9: memref<8x1xf32, #tpu.memory_space<vmem>>, %arg10: memref<8x4xbf16, #tpu.memory_space<vmem>>, %arg11: memref<8x1xf32, #tpu.memory_space<vmem>>, %arg12: memref<8x512xf32, #tpu.memory_space<vmem>>) attributes {dimension_semantics = [], scalar_prefetch = 0 : i64, scratch_operands = 0 : i64, tpu.core_type = #tpu.core_type<tc>} {
    %c0 = arith.constant 0 : index
    %c0_0 = arith.constant 0 : index
    %0 = vector.load %arg0[%c0, %c0_0] : memref<4x512xf32, #tpu.memory_space<vmem>>, vector<4x512xf32>
    %c0_1 = arith.constant 0 : index
    %c0_2 = arith.constant 0 : index
    %1 = vector.load %arg1[%c0_1, %c0_2] : memref<9x512xf32, #tpu.memory_space<vmem>>, vector<9x512xf32>
    %c0_3 = arith.constant 0 : index
    %c0_4 = arith.constant 0 : index
    %2 = vector.load %arg2[%c0_3, %c0_4] : memref<4x512xf32, #tpu.memory_space<vmem>>, vector<4x512xf32>
    %c0_5 = arith.constant 0 : index
    %c0_6 = arith.constant 0 : index
    %3 = vector.load %arg3[%c0_5, %c0_6] : memref<4x512xf32, #tpu.memory_space<vmem>>, vector<4x512xf32>
    %cst = arith.constant dense<0.000000e+00> : vector<4xf32>
    %4 = vector.multi_reduction <add>, %0, %cst [1] : vector<4x512xf32> to vector<4xf32>
    %5 = vector.shape_cast %4 : vector<4xf32> to vector<4x1xf32>
    %cst_7 = arith.constant 0.001953125 : f32
    %6 = vector.broadcast %cst_7 : f32 to vector<4x1xf32>
    %7 = arith.mulf %5, %6 : vector<4x1xf32>
    %8 = arith.mulf %0, %0 : vector<4x512xf32>
    %cst_8 = arith.constant dense<0.000000e+00> : vector<4xf32>
    %9 = vector.multi_reduction <add>, %8, %cst_8 [1] : vector<4x512xf32> to vector<4xf32>
    %10 = vector.shape_cast %9 : vector<4xf32> to vector<4x1xf32>
    %cst_9 = arith.constant 0.001953125 : f32
    %11 = vector.broadcast %cst_9 : f32 to vector<4x1xf32>
    %12 = arith.mulf %10, %11 : vector<4x1xf32>
    %13 = arith.mulf %7, %7 : vector<4x1xf32>
    %14 = arith.subf %12, %13 : vector<4x1xf32>
    %cst_10 = arith.constant 9.99999974E-6 : f32
    %15 = vector.broadcast %cst_10 : f32 to vector<4x1xf32>
    %16 = arith.addf %14, %15 : vector<4x1xf32>
    %17 = math.rsqrt %16 : vector<4x1xf32>
    %18 = vector.broadcast %7 : vector<4x1xf32> to vector<4x512xf32>
    %19 = arith.subf %0, %18 : vector<4x512xf32>
    %20 = vector.broadcast %17 : vector<4x1xf32> to vector<4x512xf32>
    %21 = arith.mulf %19, %20 : vector<4x512xf32>
    %22 = arith.mulf %2, %21 : vector<4x512xf32>
    %23 = arith.addf %22, %3 : vector<4x512xf32>
    %cst_11 = arith.constant 0.000000e+00 : f32
    %24 = vector.broadcast %cst_11 : f32 to vector<4x512xf32>
    %25 = arith.maximumf %23, %24 : vector<4x512xf32>
    %c0_12 = arith.constant 0 : index
    %c0_13 = arith.constant 0 : index
    %c0_14 = arith.constant 0 : index
    %26 = vector.load %arg6[%c0_12, %c0_13, %c0_14] : memref<9x8x4xbf16, #tpu.memory_space<vmem>>, vector<9x8x4xbf16>
    %cst_15 = arith.constant 0.000000e+00 : f32
    %27 = vector.broadcast %cst_15 : f32 to vector<8x512xf32>
    %c17_i32 = arith.constant 17 : i32
    %28 = tpu.dynamic_rotate %25 by %c17_i32 dim 1 : vector<4x512xf32>, i32 -> vector<4x512xf32>
    %29 = vector.extract_strided_slice %1 {offsets = [0, 0], sizes = [1, 512], strides = [1, 1]} : vector<9x512xf32> to vector<1x512xf32>
    %30 = vector.broadcast %29 : vector<1x512xf32> to vector<4x512xf32>
    %31 = arith.mulf %28, %30 : vector<4x512xf32>
    %32 = vector.extract_strided_slice %26 {offsets = [0, 0, 0], sizes = [1, 8, 4], strides = [1, 1, 1]} : vector<9x8x4xbf16> to vector<1x8x4xbf16>
    %33 = vector.shape_cast %32 : vector<1x8x4xbf16> to vector<8x4xbf16>
    %34 = arith.truncf %31 : vector<4x512xf32> to vector<4x512xbf16>
    %cst_16 = arith.constant dense<0.000000e+00> : vector<8x512xf32>
    %35 = tpu.matmul %33, %34, %cst_16 {dimension_numbers = #tpu.dot_dimension_numbers<[1], [0], [0], [1], [0, 0, 1, 1], [], []>} : vector<8x4xbf16>, vector<4x512xbf16>, vector<8x512xf32> -> vector<8x512xf32>
    %36 = arith.addf %27, %35 : vector<8x512xf32>
    %c16_i32 = arith.constant 16 : i32
    %37 = tpu.dynamic_rotate %25 by %c16_i32 dim 1 : vector<4x512xf32>, i32 -> vector<4x512xf32>
    %38 = vector.extract_strided_slice %1 {offsets = [1, 0], sizes = [1, 512], strides = [1, 1]} : vector<9x512xf32> to vector<1x512xf32>
    %39 = vector.broadcast %38 : vector<1x512xf32> to vector<4x512xf32>
    %40 = arith.mulf %37, %39 : vector<4x512xf32>
    %41 = vector.extract_strided_slice %26 {offsets = [1, 0, 0], sizes = [1, 8, 4], strides = [1, 1, 1]} : vector<9x8x4xbf16> to vector<1x8x4xbf16>
    %42 = vector.shape_cast %41 : vector<1x8x4xbf16> to vector<8x4xbf16>
    %43 = arith.truncf %40 : vector<4x512xf32> to vector<4x512xbf16>
    %cst_17 = arith.constant dense<0.000000e+00> : vector<8x512xf32>
    %44 = tpu.matmul %42, %43, %cst_17 {dimension_numbers = #tpu.dot_dimension_numbers<[1], [0], [0], [1], [0, 0, 1, 1], [], []>} : vector<8x4xbf16>, vector<4x512xbf16>, vector<8x512xf32> -> vector<8x512xf32>
    %45 = arith.addf %36, %44 : vector<8x512xf32>
    %c15_i32 = arith.constant 15 : i32
    %46 = tpu.dynamic_rotate %25 by %c15_i32 dim 1 : vector<4x512xf32>, i32 -> vector<4x512xf32>
    %47 = vector.extract_strided_slice %1 {offsets = [2, 0], sizes = [1, 512], strides = [1, 1]} : vector<9x512xf32> to vector<1x512xf32>
    %48 = vector.broadcast %47 : vector<1x512xf32> to vector<4x512xf32>
    %49 = arith.mulf %46, %48 : vector<4x512xf32>
    %50 = vector.extract_strided_slice %26 {offsets = [2, 0, 0], sizes = [1, 8, 4], strides = [1, 1, 1]} : vector<9x8x4xbf16> to vector<1x8x4xbf16>
    %51 = vector.shape_cast %50 : vector<1x8x4xbf16> to vector<8x4xbf16>
    %52 = arith.truncf %49 : vector<4x512xf32> to vector<4x512xbf16>
    %cst_18 = arith.constant dense<0.000000e+00> : vector<8x512xf32>
    %53 = tpu.matmul %51, %52, %cst_18 {dimension_numbers = #tpu.dot_dimension_numbers<[1], [0], [0], [1], [0, 0, 1, 1], [], []>} : vector<8x4xbf16>, vector<4x512xbf16>, vector<8x512xf32> -> vector<8x512xf32>
    %54 = arith.addf %45, %53 : vector<8x512xf32>
    %c1_i32 = arith.constant 1 : i32
    %55 = tpu.dynamic_rotate %25 by %c1_i32 dim 1 : vector<4x512xf32>, i32 -> vector<4x512xf32>
    %56 = vector.extract_strided_slice %1 {offsets = [3, 0], sizes = [1, 512], strides = [1, 1]} : vector<9x512xf32> to vector<1x512xf32>
    %57 = vector.broadcast %56 : vector<1x512xf32> to vector<4x512xf32>
    %58 = arith.mulf %55, %57 : vector<4x512xf32>
    %59 = vector.extract_strided_slice %26 {offsets = [3, 0, 0], sizes = [1, 8, 4], strides = [1, 1, 1]} : vector<9x8x4xbf16> to vector<1x8x4xbf16>
    %60 = vector.shape_cast %59 : vector<1x8x4xbf16> to vector<8x4xbf16>
    %61 = arith.truncf %58 : vector<4x512xf32> to vector<4x512xbf16>
    %cst_19 = arith.constant dense<0.000000e+00> : vector<8x512xf32>
    %62 = tpu.matmul %60, %61, %cst_19 {dimension_numbers = #tpu.dot_dimension_numbers<[1], [0], [0], [1], [0, 0, 1, 1], [], []>} : vector<8x4xbf16>, vector<4x512xbf16>, vector<8x512xf32> -> vector<8x512xf32>
    %63 = arith.addf %54, %62 : vector<8x512xf32>
    %64 = vector.extract_strided_slice %26 {offsets = [4, 0, 0], sizes = [1, 8, 4], strides = [1, 1, 1]} : vector<9x8x4xbf16> to vector<1x8x4xbf16>
    %65 = vector.shape_cast %64 : vector<1x8x4xbf16> to vector<8x4xbf16>
    %66 = arith.truncf %25 : vector<4x512xf32> to vector<4x512xbf16>
    %cst_20 = arith.constant dense<0.000000e+00> : vector<8x512xf32>
    %67 = tpu.matmul %65, %66, %cst_20 {dimension_numbers = #tpu.dot_dimension_numbers<[1], [0], [0], [1], [0, 0, 1, 1], [], []>} : vector<8x4xbf16>, vector<4x512xbf16>, vector<8x512xf32> -> vector<8x512xf32>
    %68 = arith.addf %63, %67 : vector<8x512xf32>
    %c511_i32 = arith.constant 511 : i32
    %69 = tpu.dynamic_rotate %25 by %c511_i32 dim 1 : vector<4x512xf32>, i32 -> vector<4x512xf32>
    %70 = vector.extract_strided_slice %1 {offsets = [5, 0], sizes = [1, 512], strides = [1, 1]} : vector<9x512xf32> to vector<1x512xf32>
    %71 = vector.broadcast %70 : vector<1x512xf32> to vector<4x512xf32>
    %72 = arith.mulf %69, %71 : vector<4x512xf32>
    %73 = vector.extract_strided_slice %26 {offsets = [5, 0, 0], sizes = [1, 8, 4], strides = [1, 1, 1]} : vector<9x8x4xbf16> to vector<1x8x4xbf16>
    %74 = vector.shape_cast %73 : vector<1x8x4xbf16> to vector<8x4xbf16>
    %75 = arith.truncf %72 : vector<4x512xf32> to vector<4x512xbf16>
    %cst_21 = arith.constant dense<0.000000e+00> : vector<8x512xf32>
    %76 = tpu.matmul %74, %75, %cst_21 {dimension_numbers = #tpu.dot_dimension_numbers<[1], [0], [0], [1], [0, 0, 1, 1], [], []>} : vector<8x4xbf16>, vector<4x512xbf16>, vector<8x512xf32> -> vector<8x512xf32>
    %77 = arith.addf %68, %76 : vector<8x512xf32>
    %c497_i32 = arith.constant 497 : i32
    %78 = tpu.dynamic_rotate %25 by %c497_i32 dim 1 : vector<4x512xf32>, i32 -> vector<4x512xf32>
    %79 = vector.extract_strided_slice %1 {offsets = [6, 0], sizes = [1, 512], strides = [1, 1]} : vector<9x512xf32> to vector<1x512xf32>
    %80 = vector.broadcast %79 : vector<1x512xf32> to vector<4x512xf32>
    %81 = arith.mulf %78, %80 : vector<4x512xf32>
    %82 = vector.extract_strided_slice %26 {offsets = [6, 0, 0], sizes = [1, 8, 4], strides = [1, 1, 1]} : vector<9x8x4xbf16> to vector<1x8x4xbf16>
    %83 = vector.shape_cast %82 : vector<1x8x4xbf16> to vector<8x4xbf16>
    %84 = arith.truncf %81 : vector<4x512xf32> to vector<4x512xbf16>
    %cst_22 = arith.constant dense<0.000000e+00> : vector<8x512xf32>
    %85 = tpu.matmul %83, %84, %cst_22 {dimension_numbers = #tpu.dot_dimension_numbers<[1], [0], [0], [1], [0, 0, 1, 1], [], []>} : vector<8x4xbf16>, vector<4x512xbf16>, vector<8x512xf32> -> vector<8x512xf32>
    %86 = arith.addf %77, %85 : vector<8x512xf32>
    %c496_i32 = arith.constant 496 : i32
    %87 = tpu.dynamic_rotate %25 by %c496_i32 dim 1 : vector<4x512xf32>, i32 -> vector<4x512xf32>
    %88 = vector.extract_strided_slice %1 {offsets = [7, 0], sizes = [1, 512], strides = [1, 1]} : vector<9x512xf32> to vector<1x512xf32>
    %89 = vector.broadcast %88 : vector<1x512xf32> to vector<4x512xf32>
    %90 = arith.mulf %87, %89 : vector<4x512xf32>
    %91 = vector.extract_strided_slice %26 {offsets = [7, 0, 0], sizes = [1, 8, 4], strides = [1, 1, 1]} : vector<9x8x4xbf16> to vector<1x8x4xbf16>
    %92 = vector.shape_cast %91 : vector<1x8x4xbf16> to vector<8x4xbf16>
    %93 = arith.truncf %90 : vector<4x512xf32> to vector<4x512xbf16>
    %cst_23 = arith.constant dense<0.000000e+00> : vector<8x512xf32>
    %94 = tpu.matmul %92, %93, %cst_23 {dimension_numbers = #tpu.dot_dimension_numbers<[1], [0], [0], [1], [0, 0, 1, 1], [], []>} : vector<8x4xbf16>, vector<4x512xbf16>, vector<8x512xf32> -> vector<8x512xf32>
    %95 = arith.addf %86, %94 : vector<8x512xf32>
    %c495_i32 = arith.constant 495 : i32
    %96 = tpu.dynamic_rotate %25 by %c495_i32 dim 1 : vector<4x512xf32>, i32 -> vector<4x512xf32>
    %97 = vector.extract_strided_slice %1 {offsets = [8, 0], sizes = [1, 512], strides = [1, 1]} : vector<9x512xf32> to vector<1x512xf32>
    %98 = vector.broadcast %97 : vector<1x512xf32> to vector<4x512xf32>
    %99 = arith.mulf %96, %98 : vector<4x512xf32>
    %100 = vector.extract_strided_slice %26 {offsets = [8, 0, 0], sizes = [1, 8, 4], strides = [1, 1, 1]} : vector<9x8x4xbf16> to vector<1x8x4xbf16>
    %101 = vector.shape_cast %100 : vector<1x8x4xbf16> to vector<8x4xbf16>
    %102 = arith.truncf %99 : vector<4x512xf32> to vector<4x512xbf16>
    %cst_24 = arith.constant dense<0.000000e+00> : vector<8x512xf32>
    %103 = tpu.matmul %101, %102, %cst_24 {dimension_numbers = #tpu.dot_dimension_numbers<[1], [0], [0], [1], [0, 0, 1, 1], [], []>} : vector<8x4xbf16>, vector<4x512xbf16>, vector<8x512xf32> -> vector<8x512xf32>
    %104 = arith.addf %95, %103 : vector<8x512xf32>
    %c0_25 = arith.constant 0 : index
    %c0_26 = arith.constant 0 : index
    %105 = vector.load %arg7[%c0_25, %c0_26] : memref<8x1xf32, #tpu.memory_space<vmem>>, vector<8x1xf32>
    %106 = vector.broadcast %105 : vector<8x1xf32> to vector<8x512xf32>
    %107 = arith.addf %104, %106 : vector<8x512xf32>
    %c0_27 = arith.constant 0 : index
    %c0_28 = arith.constant 0 : index
    %108 = vector.load %arg4[%c0_27, %c0_28] : memref<8x512xf32, #tpu.memory_space<vmem>>, vector<8x512xf32>
    %c0_29 = arith.constant 0 : index
    %c0_30 = arith.constant 0 : index
    %109 = vector.load %arg5[%c0_29, %c0_30] : memref<8x512xf32, #tpu.memory_space<vmem>>, vector<8x512xf32>
    %cst_31 = arith.constant dense<0.000000e+00> : vector<8xf32>
    %110 = vector.multi_reduction <add>, %107, %cst_31 [1] : vector<8x512xf32> to vector<8xf32>
    %111 = vector.shape_cast %110 : vector<8xf32> to vector<8x1xf32>
    %cst_32 = arith.constant 0.001953125 : f32
    %112 = vector.broadcast %cst_32 : f32 to vector<8x1xf32>
    %113 = arith.mulf %111, %112 : vector<8x1xf32>
    %114 = arith.mulf %107, %107 : vector<8x512xf32>
    %cst_33 = arith.constant dense<0.000000e+00> : vector<8xf32>
    %115 = vector.multi_reduction <add>, %114, %cst_33 [1] : vector<8x512xf32> to vector<8xf32>
    %116 = vector.shape_cast %115 : vector<8xf32> to vector<8x1xf32>
    %cst_34 = arith.constant 0.001953125 : f32
    %117 = vector.broadcast %cst_34 : f32 to vector<8x1xf32>
    %118 = arith.mulf %116, %117 : vector<8x1xf32>
    %119 = arith.mulf %113, %113 : vector<8x1xf32>
    %120 = arith.subf %118, %119 : vector<8x1xf32>
    %cst_35 = arith.constant 9.99999974E-6 : f32
    %121 = vector.broadcast %cst_35 : f32 to vector<8x1xf32>
    %122 = arith.addf %120, %121 : vector<8x1xf32>
    %123 = math.rsqrt %122 : vector<8x1xf32>
    %124 = vector.broadcast %113 : vector<8x1xf32> to vector<8x512xf32>
    %125 = arith.subf %107, %124 : vector<8x512xf32>
    %126 = vector.broadcast %123 : vector<8x1xf32> to vector<8x512xf32>
    %127 = arith.mulf %125, %126 : vector<8x512xf32>
    %128 = arith.mulf %108, %127 : vector<8x512xf32>
    %129 = arith.addf %128, %109 : vector<8x512xf32>
    %cst_36 = arith.constant 0.000000e+00 : f32
    %130 = vector.broadcast %cst_36 : f32 to vector<8x512xf32>
    %131 = arith.maximumf %129, %130 : vector<8x512xf32>
    %c0_37 = arith.constant 0 : index
    %c0_38 = arith.constant 0 : index
    %c0_39 = arith.constant 0 : index
    %132 = vector.load %arg8[%c0_37, %c0_38, %c0_39] : memref<9x8x8xbf16, #tpu.memory_space<vmem>>, vector<9x8x8xbf16>
    %cst_40 = arith.constant 0.000000e+00 : f32
    %133 = vector.broadcast %cst_40 : f32 to vector<8x512xf32>
    %c17_i32_41 = arith.constant 17 : i32
    %134 = tpu.dynamic_rotate %131 by %c17_i32_41 dim 1 : vector<8x512xf32>, i32 -> vector<8x512xf32>
    %135 = vector.extract_strided_slice %1 {offsets = [0, 0], sizes = [1, 512], strides = [1, 1]} : vector<9x512xf32> to vector<1x512xf32>
    %136 = vector.broadcast %135 : vector<1x512xf32> to vector<8x512xf32>
    %137 = arith.mulf %134, %136 : vector<8x512xf32>
    %138 = vector.extract_strided_slice %132 {offsets = [0, 0, 0], sizes = [1, 8, 8], strides = [1, 1, 1]} : vector<9x8x8xbf16> to vector<1x8x8xbf16>
    %139 = vector.shape_cast %138 : vector<1x8x8xbf16> to vector<8x8xbf16>
    %140 = arith.truncf %137 : vector<8x512xf32> to vector<8x512xbf16>
    %cst_42 = arith.constant dense<0.000000e+00> : vector<8x512xf32>
    %141 = tpu.matmul %139, %140, %cst_42 {dimension_numbers = #tpu.dot_dimension_numbers<[1], [0], [0], [1], [0, 0, 1, 1], [], []>} : vector<8x8xbf16>, vector<8x512xbf16>, vector<8x512xf32> -> vector<8x512xf32>
    %142 = arith.addf %133, %141 : vector<8x512xf32>
    %c16_i32_43 = arith.constant 16 : i32
    %143 = tpu.dynamic_rotate %131 by %c16_i32_43 dim 1 : vector<8x512xf32>, i32 -> vector<8x512xf32>
    %144 = vector.extract_strided_slice %1 {offsets = [1, 0], sizes = [1, 512], strides = [1, 1]} : vector<9x512xf32> to vector<1x512xf32>
    %145 = vector.broadcast %144 : vector<1x512xf32> to vector<8x512xf32>
    %146 = arith.mulf %143, %145 : vector<8x512xf32>
    %147 = vector.extract_strided_slice %132 {offsets = [1, 0, 0], sizes = [1, 8, 8], strides = [1, 1, 1]} : vector<9x8x8xbf16> to vector<1x8x8xbf16>
    %148 = vector.shape_cast %147 : vector<1x8x8xbf16> to vector<8x8xbf16>
    %149 = arith.truncf %146 : vector<8x512xf32> to vector<8x512xbf16>
    %cst_44 = arith.constant dense<0.000000e+00> : vector<8x512xf32>
    %150 = tpu.matmul %148, %149, %cst_44 {dimension_numbers = #tpu.dot_dimension_numbers<[1], [0], [0], [1], [0, 0, 1, 1], [], []>} : vector<8x8xbf16>, vector<8x512xbf16>, vector<8x512xf32> -> vector<8x512xf32>
    %151 = arith.addf %142, %150 : vector<8x512xf32>
    %c15_i32_45 = arith.constant 15 : i32
    %152 = tpu.dynamic_rotate %131 by %c15_i32_45 dim 1 : vector<8x512xf32>, i32 -> vector<8x512xf32>
    %153 = vector.extract_strided_slice %1 {offsets = [2, 0], sizes = [1, 512], strides = [1, 1]} : vector<9x512xf32> to vector<1x512xf32>
    %154 = vector.broadcast %153 : vector<1x512xf32> to vector<8x512xf32>
    %155 = arith.mulf %152, %154 : vector<8x512xf32>
    %156 = vector.extract_strided_slice %132 {offsets = [2, 0, 0], sizes = [1, 8, 8], strides = [1, 1, 1]} : vector<9x8x8xbf16> to vector<1x8x8xbf16>
    %157 = vector.shape_cast %156 : vector<1x8x8xbf16> to vector<8x8xbf16>
    %158 = arith.truncf %155 : vector<8x512xf32> to vector<8x512xbf16>
    %cst_46 = arith.constant dense<0.000000e+00> : vector<8x512xf32>
    %159 = tpu.matmul %157, %158, %cst_46 {dimension_numbers = #tpu.dot_dimension_numbers<[1], [0], [0], [1], [0, 0, 1, 1], [], []>} : vector<8x8xbf16>, vector<8x512xbf16>, vector<8x512xf32> -> vector<8x512xf32>
    %160 = arith.addf %151, %159 : vector<8x512xf32>
    %c1_i32_47 = arith.constant 1 : i32
    %161 = tpu.dynamic_rotate %131 by %c1_i32_47 dim 1 : vector<8x512xf32>, i32 -> vector<8x512xf32>
    %162 = vector.extract_strided_slice %1 {offsets = [3, 0], sizes = [1, 512], strides = [1, 1]} : vector<9x512xf32> to vector<1x512xf32>
    %163 = vector.broadcast %162 : vector<1x512xf32> to vector<8x512xf32>
    %164 = arith.mulf %161, %163 : vector<8x512xf32>
    %165 = vector.extract_strided_slice %132 {offsets = [3, 0, 0], sizes = [1, 8, 8], strides = [1, 1, 1]} : vector<9x8x8xbf16> to vector<1x8x8xbf16>
    %166 = vector.shape_cast %165 : vector<1x8x8xbf16> to vector<8x8xbf16>
    %167 = arith.truncf %164 : vector<8x512xf32> to vector<8x512xbf16>
    %cst_48 = arith.constant dense<0.000000e+00> : vector<8x512xf32>
    %168 = tpu.matmul %166, %167, %cst_48 {dimension_numbers = #tpu.dot_dimension_numbers<[1], [0], [0], [1], [0, 0, 1, 1], [], []>} : vector<8x8xbf16>, vector<8x512xbf16>, vector<8x512xf32> -> vector<8x512xf32>
    %169 = arith.addf %160, %168 : vector<8x512xf32>
    %170 = vector.extract_strided_slice %132 {offsets = [4, 0, 0], sizes = [1, 8, 8], strides = [1, 1, 1]} : vector<9x8x8xbf16> to vector<1x8x8xbf16>
    %171 = vector.shape_cast %170 : vector<1x8x8xbf16> to vector<8x8xbf16>
    %172 = arith.truncf %131 : vector<8x512xf32> to vector<8x512xbf16>
    %cst_49 = arith.constant dense<0.000000e+00> : vector<8x512xf32>
    %173 = tpu.matmul %171, %172, %cst_49 {dimension_numbers = #tpu.dot_dimension_numbers<[1], [0], [0], [1], [0, 0, 1, 1], [], []>} : vector<8x8xbf16>, vector<8x512xbf16>, vector<8x512xf32> -> vector<8x512xf32>
    %174 = arith.addf %169, %173 : vector<8x512xf32>
    %c511_i32_50 = arith.constant 511 : i32
    %175 = tpu.dynamic_rotate %131 by %c511_i32_50 dim 1 : vector<8x512xf32>, i32 -> vector<8x512xf32>
    %176 = vector.extract_strided_slice %1 {offsets = [5, 0], sizes = [1, 512], strides = [1, 1]} : vector<9x512xf32> to vector<1x512xf32>
    %177 = vector.broadcast %176 : vector<1x512xf32> to vector<8x512xf32>
    %178 = arith.mulf %175, %177 : vector<8x512xf32>
    %179 = vector.extract_strided_slice %132 {offsets = [5, 0, 0], sizes = [1, 8, 8], strides = [1, 1, 1]} : vector<9x8x8xbf16> to vector<1x8x8xbf16>
    %180 = vector.shape_cast %179 : vector<1x8x8xbf16> to vector<8x8xbf16>
    %181 = arith.truncf %178 : vector<8x512xf32> to vector<8x512xbf16>
    %cst_51 = arith.constant dense<0.000000e+00> : vector<8x512xf32>
    %182 = tpu.matmul %180, %181, %cst_51 {dimension_numbers = #tpu.dot_dimension_numbers<[1], [0], [0], [1], [0, 0, 1, 1], [], []>} : vector<8x8xbf16>, vector<8x512xbf16>, vector<8x512xf32> -> vector<8x512xf32>
    %183 = arith.addf %174, %182 : vector<8x512xf32>
    %c497_i32_52 = arith.constant 497 : i32
    %184 = tpu.dynamic_rotate %131 by %c497_i32_52 dim 1 : vector<8x512xf32>, i32 -> vector<8x512xf32>
    %185 = vector.extract_strided_slice %1 {offsets = [6, 0], sizes = [1, 512], strides = [1, 1]} : vector<9x512xf32> to vector<1x512xf32>
    %186 = vector.broadcast %185 : vector<1x512xf32> to vector<8x512xf32>
    %187 = arith.mulf %184, %186 : vector<8x512xf32>
    %188 = vector.extract_strided_slice %132 {offsets = [6, 0, 0], sizes = [1, 8, 8], strides = [1, 1, 1]} : vector<9x8x8xbf16> to vector<1x8x8xbf16>
    %189 = vector.shape_cast %188 : vector<1x8x8xbf16> to vector<8x8xbf16>
    %190 = arith.truncf %187 : vector<8x512xf32> to vector<8x512xbf16>
    %cst_53 = arith.constant dense<0.000000e+00> : vector<8x512xf32>
    %191 = tpu.matmul %189, %190, %cst_53 {dimension_numbers = #tpu.dot_dimension_numbers<[1], [0], [0], [1], [0, 0, 1, 1], [], []>} : vector<8x8xbf16>, vector<8x512xbf16>, vector<8x512xf32> -> vector<8x512xf32>
    %192 = arith.addf %183, %191 : vector<8x512xf32>
    %c496_i32_54 = arith.constant 496 : i32
    %193 = tpu.dynamic_rotate %131 by %c496_i32_54 dim 1 : vector<8x512xf32>, i32 -> vector<8x512xf32>
    %194 = vector.extract_strided_slice %1 {offsets = [7, 0], sizes = [1, 512], strides = [1, 1]} : vector<9x512xf32> to vector<1x512xf32>
    %195 = vector.broadcast %194 : vector<1x512xf32> to vector<8x512xf32>
    %196 = arith.mulf %193, %195 : vector<8x512xf32>
    %197 = vector.extract_strided_slice %132 {offsets = [7, 0, 0], sizes = [1, 8, 8], strides = [1, 1, 1]} : vector<9x8x8xbf16> to vector<1x8x8xbf16>
    %198 = vector.shape_cast %197 : vector<1x8x8xbf16> to vector<8x8xbf16>
    %199 = arith.truncf %196 : vector<8x512xf32> to vector<8x512xbf16>
    %cst_55 = arith.constant dense<0.000000e+00> : vector<8x512xf32>
    %200 = tpu.matmul %198, %199, %cst_55 {dimension_numbers = #tpu.dot_dimension_numbers<[1], [0], [0], [1], [0, 0, 1, 1], [], []>} : vector<8x8xbf16>, vector<8x512xbf16>, vector<8x512xf32> -> vector<8x512xf32>
    %201 = arith.addf %192, %200 : vector<8x512xf32>
    %c495_i32_56 = arith.constant 495 : i32
    %202 = tpu.dynamic_rotate %131 by %c495_i32_56 dim 1 : vector<8x512xf32>, i32 -> vector<8x512xf32>
    %203 = vector.extract_strided_slice %1 {offsets = [8, 0], sizes = [1, 512], strides = [1, 1]} : vector<9x512xf32> to vector<1x512xf32>
    %204 = vector.broadcast %203 : vector<1x512xf32> to vector<8x512xf32>
    %205 = arith.mulf %202, %204 : vector<8x512xf32>
    %206 = vector.extract_strided_slice %132 {offsets = [8, 0, 0], sizes = [1, 8, 8], strides = [1, 1, 1]} : vector<9x8x8xbf16> to vector<1x8x8xbf16>
    %207 = vector.shape_cast %206 : vector<1x8x8xbf16> to vector<8x8xbf16>
    %208 = arith.truncf %205 : vector<8x512xf32> to vector<8x512xbf16>
    %cst_57 = arith.constant dense<0.000000e+00> : vector<8x512xf32>
    %209 = tpu.matmul %207, %208, %cst_57 {dimension_numbers = #tpu.dot_dimension_numbers<[1], [0], [0], [1], [0, 0, 1, 1], [], []>} : vector<8x8xbf16>, vector<8x512xbf16>, vector<8x512xf32> -> vector<8x512xf32>
    %210 = arith.addf %201, %209 : vector<8x512xf32>
    %c0_58 = arith.constant 0 : index
    %c0_59 = arith.constant 0 : index
    %211 = vector.load %arg9[%c0_58, %c0_59] : memref<8x1xf32, #tpu.memory_space<vmem>>, vector<8x1xf32>
    %212 = vector.broadcast %211 : vector<8x1xf32> to vector<8x512xf32>
    %213 = arith.addf %210, %212 : vector<8x512xf32>
    %c0_60 = arith.constant 0 : index
    %c0_61 = arith.constant 0 : index
    %214 = vector.load %arg10[%c0_60, %c0_61] : memref<8x4xbf16, #tpu.memory_space<vmem>>, vector<8x4xbf16>
    %215 = arith.truncf %0 : vector<4x512xf32> to vector<4x512xbf16>
    %cst_62 = arith.constant dense<0.000000e+00> : vector<8x512xf32>
    %216 = tpu.matmul %214, %215, %cst_62 {dimension_numbers = #tpu.dot_dimension_numbers<[1], [0], [0], [1], [0, 0, 1, 1], [], []>} : vector<8x4xbf16>, vector<4x512xbf16>, vector<8x512xf32> -> vector<8x512xf32>
    %c0_63 = arith.constant 0 : index
    %c0_64 = arith.constant 0 : index
    %217 = vector.load %arg11[%c0_63, %c0_64] : memref<8x1xf32, #tpu.memory_space<vmem>>, vector<8x1xf32>
    %218 = vector.broadcast %217 : vector<8x1xf32> to vector<8x512xf32>
    %219 = arith.addf %216, %218 : vector<8x512xf32>
    %220 = arith.addf %219, %213 : vector<8x512xf32>
    %c0_65 = arith.constant 0 : index
    %c0_66 = arith.constant 0 : index
    %221 = vector.load %arg12[%c0_65, %c0_66] : memref<8x512xf32, #tpu.memory_space<vmem>>, vector<8x512xf32>
    tpu.vector_store %arg12[%c0_65, %c0_66], %220 {strides = array<i32>} : memref<8x512xf32, #tpu.memory_space<vmem>>, vector<8x512xf32>,
    return
  }
}

</mosaic_0001>

<llo_original>
// kernel: tpu_custom_call.1
$region0: #{tpu_custom_call.1}
  #allocation0 [shape = 'u32[]', space=smem, size = 0x4, offset = 0x4, fixed_abs, tag = 'smem constant byte address 0x4 - core index']
  #allocation1 [shape = 'u32[144,128]{1,0:T(1,128)}', space=vmem, size = 0x12000, scoped, tag = 'internal scratch']
  %s0 = inlined_call_operand.hbm [shape: f32[4,512], index: 0, kind: input, shape index: {}]
  %s1 = inlined_call_operand.vmem [shape: f32[9,512], index: 1, kind: input, shape index: {}]
  %s2 = inlined_call_operand.hbm [shape: f32[4,512], index: 2, kind: input, shape index: {}]
  %s3 = inlined_call_operand.hbm [shape: f32[4,512], index: 3, kind: input, shape index: {}]
  %s4 = inlined_call_operand.vmem [shape: f32[8,512], index: 4, kind: input, shape index: {}]
  %s5 = inlined_call_operand.vmem [shape: f32[8,512], index: 5, kind: input, shape index: {}]
  %s6 = inlined_call_operand.vmem [shape: bf16[9,8,4], index: 6, kind: input, shape index: {}]
  %s7 = inlined_call_operand.vmem [shape: f32[8,1], index: 7, kind: input, shape index: {}]
  %s8 = inlined_call_operand.vmem [shape: bf16[9,8,8], index: 8, kind: input, shape index: {}]
  %s9 = inlined_call_operand.vmem [shape: f32[8,1], index: 9, kind: input, shape index: {}]
  %s10 = inlined_call_operand.vmem [shape: bf16[8,4], index: 10, kind: input, shape index: {}]
  %s11 = inlined_call_operand.vmem [shape: f32[8,1], index: 11, kind: input, shape index: {}]
  %s12 = inlined_call_operand.hbm [shape: f32[8,512], index: 12, kind: output, shape index: {}]
  %s13 = sld [smem:[#allocation0]]
  $region70: #{tpu_custom_call.1} parent=0
    _
  %s15 = ssub.s32 1, %s13
  %s16 = scalar_select 0, %s15, %s13
  $region1: #{tpu_custom_call.1} parent=0
    #allocation2 [shape = 'u8[8192]{0}', space=vmem, size = 0x2000, scoped, tag = 'input window, operand 0, single buffered']
    #allocation3 [shape = 's32[1]{0}', space=sflag, size = 0x4, scoped, tag = 'scoped memory for tpu_custom_call.1']
    #allocation4 [shape = 's32[1]{0}', space=sflag, size = 0x4, scoped, tag = 'scoped memory for tpu_custom_call.1']
    #allocation5 [shape = 'u8[8192]{0}', space=vmem, size = 0x2000, scoped, tag = 'input window, operand 2, single buffered']
    #allocation6 [shape = 's32[1]{0}', space=sflag, size = 0x4, scoped, tag = 'scoped memory for tpu_custom_call.1']
    #allocation7 [shape = 'u8[8192]{0}', space=vmem, size = 0x2000, scoped, tag = 'input window, operand 3, single buffered']
    #allocation8 [shape = 'u8[16384]{0}', space=vmem, size = 0x4000, scoped, tag = 'output window, operand 0, single buffered']
    %17 = vsyncpa [#allocation3], 0
    %18 = vsyncpa [#allocation6], 0
    %19 = vsyncpa [#allocation4], 0
    // Predicated region
    $region2: #{tpu_custom_call.1} parent=1 // pred_check
      _
    $region3: #{tpu_custom_call.1} parent=1 // pred_check_branch
      %21 = sbr.rel (0) target = $region5
    $region4: #{tpu_custom_call.1} parent=1 // pred_region
      %s23 = ssub.s32 256, 256
      %24 = vsyncadd [#allocation3], %s23
      %s26 = sshll.u32 [#allocation2], 4
      %s27 = int_to_ptr.vmem [resolvable:$true] %s26
      %29 = dma.hbm_to_vmem [thread:$0]  %s0, 256, %s27, [#allocation3]
    $region5: #{tpu_custom_call.1} parent=1 // pred_fallthru
      _
    // Predicated region
    $region6: #{tpu_custom_call.1} parent=1 // pred_check
      _
    $region7: #{tpu_custom_call.1} parent=1 // pred_check_branch
      %31 = sbr.rel (0) target = $region9
    $region8: #{tpu_custom_call.1} parent=1 // pred_region
      _
    $region9: #{tpu_custom_call.1} parent=1 // pred_fallthru
      _
    // Predicated region
    $region10: #{tpu_custom_call.1} parent=1 // pred_check
      _
    $region11: #{tpu_custom_call.1} parent=1 // pred_check_branch
      %33 = sbr.rel (0) target = $region13
    $region12: #{tpu_custom_call.1} parent=1 // pred_region
      %s35 = ssub.s32 256, 256
      %36 = vsyncadd [#allocation6], %s35
      %s38 = sshll.u32 [#allocation5], 4
      %s39 = int_to_ptr.vmem [resolvable:$true] %s38
      %41 = dma.hbm_to_vmem [thread:$0]  %s2, 256, %s39, [#allocation6]
    $region13: #{tpu_custom_call.1} parent=1 // pred_fallthru
      _
    // Predicated region
    $region14: #{tpu_custom_call.1} parent=1 // pred_check
      _
    $region15: #{tpu_custom_call.1} parent=1 // pred_check_branch
      %43 = sbr.rel (0) target = $region17
    $region16: #{tpu_custom_call.1} parent=1 // pred_region
      %s45 = ssub.s32 256, 256
      %46 = vsyncadd [#allocation6], %s45
      %s48 = sshll.u32 [#allocation7], 4
      %s49 = int_to_ptr.vmem [resolvable:$true] %s48
      %51 = dma.hbm_to_vmem [thread:$0]  %s3, 256, %s49, [#allocation6]
    $region17: #{tpu_custom_call.1} parent=1 // pred_fallthru
      _
    // Predicated region
    $region18: #{tpu_custom_call.1} parent=1 // pred_check
      _
    $region19: #{tpu_custom_call.1} parent=1 // pred_check_branch
      %53 = sbr.rel (0) target = $region21
    $region20: #{tpu_custom_call.1} parent=1 // pred_region
      _
    $region21: #{tpu_custom_call.1} parent=1 // pred_fallthru
      _
    // Predicated region
    $region22: #{tpu_custom_call.1} parent=1 // pred_check
      _
    $region23: #{tpu_custom_call.1} parent=1 // pred_check_branch
      %55 = sbr.rel (0) target = $region25
    $region24: #{tpu_custom_call.1} parent=1 // pred_region
      _
    $region25: #{tpu_custom_call.1} parent=1 // pred_fallthru
      _
    // Predicated region
    $region26: #{tpu_custom_call.1} parent=1 // pred_check
      _
    $region27: #{tpu_custom_call.1} parent=1 // pred_check_branch
      %57 = sbr.rel (0) target = $region29
    $region28: #{tpu_custom_call.1} parent=1 // pred_region
      _
    $region29: #{tpu_custom_call.1} parent=1 // pred_fallthru
      _
    // Predicated region
    $region30: #{tpu_custom_call.1} parent=1 // pred_check
      _
    $region31: #{tpu_custom_call.1} parent=1 // pred_check_branch
      %59 = sbr.rel (0) target = $region33
    $region32: #{tpu_custom_call.1} parent=1 // pred_region
      _
    $region33: #{tpu_custom_call.1} parent=1 // pred_fallthru
      _
    // Predicated region
    $region34: #{tpu_custom_call.1} parent=1 // pred_check
      _
    $region35: #{tpu_custom_call.1} parent=1 // pred_check_branch
      %61 = sbr.rel (0) target = $region37
    $region36: #{tpu_custom_call.1} parent=1 // pred_region
      _
    $region37: #{tpu_custom_call.1} parent=1 // pred_fallthru
      _
    // Predicated region
    $region38: #{tpu_custom_call.1} parent=1 // pred_check
      _
    $region39: #{tpu_custom_call.1} parent=1 // pred_check_branch
      %63 = sbr.rel (0) target = $region41
    $region40: #{tpu_custom_call.1} parent=1 // pred_region
      _
    $region41: #{tpu_custom_call.1} parent=1 // pred_fallthru
      _
    // Predicated region
    $region42: #{tpu_custom_call.1} parent=1 // pred_check
      _
    $region43: #{tpu_custom_call.1} parent=1 // pred_check_branch
      %65 = sbr.rel (0) target = $region45
    $region44: #{tpu_custom_call.1} parent=1 // pred_region
      _
    $region45: #{tpu_custom_call.1} parent=1 // pred_fallthru
      _
    // Predicated region
    $region46: #{tpu_custom_call.1} parent=1 // pred_check
      _
    $region47: #{tpu_custom_call.1} parent=1 // pred_check_branch
      %67 = sbr.rel (0) target = $region49
    $region48: #{tpu_custom_call.1} parent=1 // pred_region
      _
    $region49: #{tpu_custom_call.1} parent=1 // pred_fallthru
      _
    // Predicated region
    $region50: #{tpu_custom_call.1} parent=1 // pred_check
      _
    $region51: #{tpu_custom_call.1} parent=1 // pred_check_branch
      %69 = sbr.rel (0) target = $region53
    $region52: #{tpu_custom_call.1} parent=1 // pred_region
      %70 = dma.done [#allocation3], 256
    $region53: #{tpu_custom_call.1} parent=1 // pred_fallthru
      _
    // Predicated region
    $region54: #{tpu_custom_call.1} parent=1 // pred_check
      _
    $region55: #{tpu_custom_call.1} parent=1 // pred_check_branch
      %72 = sbr.rel (0) target = $region57
    $region56: #{tpu_custom_call.1} parent=1 // pred_region
      %73 = dma.done [#allocation6], 256
    $region57: #{tpu_custom_call.1} parent=1 // pred_fallthru
      _
    // Predicated region
    $region58: #{tpu_custom_call.1} parent=1 // pred_check
      _
    $region59: #{tpu_custom_call.1} parent=1 // pred_check_branch
      %75 = sbr.rel (0) target = $region61
    $region60: #{tpu_custom_call.1} parent=1 // pred_region
      %76 = dma.done [#allocation6], 256
    $region61: #{tpu_custom_call.1} parent=1 // pred_fallthru
      _
    %v78 = vld [vmem:[#allocation2] sm:$0xff]
    %v79 = vld [vmem:[#allocation2 + $0x8] sm:$0xff]
    %v80 = vld [vmem:[%s1] sm:$0xff]
    %v81 = vld [vmem:[%s1 + $0x8] sm:$0xff]
    %v82 = vld [vmem:[%s1 + $0x10] sm:$0xff]
    %v83 = vld [vmem:[%s1 + $0x18] sm:$0xff]
    %v84 = vld [vmem:[%s1 + $0x20] sm:$0x1]
    %v85 = vld [vmem:[%s1 + $0x28] sm:$0x1]
    %v86 = vld [vmem:[%s1 + $0x30] sm:$0x1]
    %v87 = vld [vmem:[%s1 + $0x38] sm:$0x1]
    %v88 = vld [vmem:[#allocation5] sm:$0xff]
    %v89 = vld [vmem:[#allocation5 + $0x8] sm:$0xff]
    %v90 = vld [vmem:[#allocation7] sm:$0xff]
    %v91 = vld [vmem:[#allocation7 + $0x8] sm:$0xff]
    %v94 = vcombine.high %v78, %v78
    %v95 = vcombine.high %v79, %v79
    %vm98 = vcmask 1043456
    %v99 = vsel %vm98, %v78, 0.0
    %v100 = vsel %vm98, %v94, 0.0
    %v101 = vadd.f32 %v99, %v100
    %v102 = vsel %vm98, %v79, 0.0
    %v103 = vadd.f32 %v101, %v102
    %v104 = vsel %vm98, %v95, 0.0
    %v105 = vadd.f32 %v103, %v104
    %106 = vadd.xlane.f32.xlu0 %v105
    %v107 = vpop.xlane.xlu0 %106
    %v108 = vmul.f32 %v107, 0.001953125
    %v109 = vmul.f32 %v78, %v78
    %v110 = vmul.f32 %v79, %v79
    %v113 = vcombine.high %v109, %v109
    %v114 = vcombine.high %v110, %v110
    %v117 = vsel %vm98, %v109, 0.0
    %v118 = vsel %vm98, %v113, 0.0
    %v119 = vadd.f32 %v117, %v118
    %v120 = vsel %vm98, %v110, 0.0
    %v121 = vadd.f32 %v119, %v120
    %v122 = vsel %vm98, %v114, 0.0
    %v123 = vadd.f32 %v121, %v122
    %124 = vadd.xlane.f32.xlu0 %v123
    %v125 = vpop.xlane.xlu0 %124
    %v126 = vmul.f32 %v125, 0.001953125
    %v127 = vmul.f32 %v108, %v108
    %v128 = vsub.f32 %v126, %v127
    %v129 = vadd.f32 %v128, 1e-05
    %v130 = vrsqrt.pop %v129
    %v133 = vunpack.c.l.s4 839922192
    %v134 = vunpack.c.0.s8 %v133
    %v135 = vlaneseq
    %v136 = vshrl.u32 %v135, 7
    %v137 = vsub.s32 %v134, %v136
    %v138 = vrot.slane %v108, %v137
    %v140 = vsub.f32 %v78, %v138
    %v141 = vsub.f32 %v79, %v138
    %v144 = vunpack.c.l.s4 839922192
    %v145 = vunpack.c.0.s8 %v144
    %v146 = vlaneseq
    %v147 = vshrl.u32 %v146, 7
    %v148 = vsub.s32 %v145, %v147
    %v149 = vrot.slane %v130, %v148
    %v151 = vmul.f32 %v140, %v149
    %v152 = vmul.f32 %v141, %v149
    %v153 = vmul.f32 %v88, %v151
    %v154 = vmul.f32 %v89, %v152
    %v155 = vadd.f32 %v153, %v90
    %v156 = vadd.f32 %v154, %v91
    %v157 = vmax.f32 %v155, 0.0
    %v158 = vmax.f32 %v156, 0.0
    %v159 = vld [vmem:[%s6] sm:$0xf]
    %v160 = vld [vmem:[%s6 + $0x4] sm:$0xf]
    %v161 = vld [vmem:[%s6 + $0x8] sm:$0xf]
    %v162 = vld [vmem:[%s6 + $0xc] sm:$0xf]
    %v163 = vld [vmem:[%s6 + $0x10] sm:$0xf]
    %v164 = vld [vmem:[%s6 + $0x14] sm:$0xf]
    %v165 = vld [vmem:[%s6 + $0x18] sm:$0xf]
    %v166 = vld [vmem:[%s6 + $0x1c] sm:$0xf]
    %v167 = vld [vmem:[%s6 + $0x20] sm:$0xf]
    %v170 = vcombine.high %v157, %v157
    %v171 = vcombine.high %v158, %v158
    %174 = vrot.lane.b32.xlu0 %v157, 17
    %v175 = vpop.permute.xlu0 %174
    %176 = vrot.lane.b32.xlu0 %v170, 17
    %v177 = vpop.permute.xlu0 %176
    %178 = vrot.lane.b32.xlu0 %v158, 17
    %v179 = vpop.permute.xlu0 %178
    %180 = vrot.lane.b32.xlu0 %v171, 17
    %v181 = vpop.permute.xlu0 %180
    %v182 = vlaneseq
    %v183 = vand.u32 %v182, 127
    %vm184 = vcmp.lt.s32.totalorder %v183, 17
    %v185 = vsel %vm184, %v179, %v181
    %v186 = vsel %vm184, %v177, %v179
    %v187 = vsel %vm184, %v175, %v177
    %v188 = vsel %vm184, %v181, %v175
    %v189 = vlaneseq
    %v190 = vshrl.u32 %v189, 7
    %v191 = vsub.s32 0, %v190
    %v192 = vrot.slane %v80, %v191
    %v193 = vlaneseq
    %v194 = vshrl.u32 %v193, 7
    %v195 = vsub.s32 0, %v194
    %v196 = vrot.slane %v81, %v195
    %v197 = vlaneseq
    %v198 = vshrl.u32 %v197, 7
    %v199 = vsub.s32 0, %v198
    %v200 = vrot.slane %v82, %v199
    %v201 = vlaneseq
    %v202 = vshrl.u32 %v201, 7
    %v203 = vsub.s32 0, %v202
    %v204 = vrot.slane %v83, %v203
    %v205 = vmul.f32 %v188, %v192
    %v206 = vmul.f32 %v187, %v196
    %v207 = vmul.f32 %v186, %v200
    %v208 = vmul.f32 %v185, %v204
    %v209 = vpack.c.bf16 %v205, %v205
    %v210 = vpack.c.bf16 %v206, %v206
    %v211 = vpack.c.bf16 %v207, %v207
    %v212 = vpack.c.bf16 %v208, %v208
    %213 = vrot.lane.b32.xlu0 %v157, 16
    %v214 = vpop.permute.xlu0 %213
    %215 = vrot.lane.b32.xlu0 %v170, 16
    %v216 = vpop.permute.xlu0 %215
    %217 = vrot.lane.b32.xlu0 %v158, 16
    %v218 = vpop.permute.xlu0 %217
    %219 = vrot.lane.b32.xlu0 %v171, 16
    %v220 = vpop.permute.xlu0 %219
    %vm221 = vcmp.lt.s32.totalorder %v183, 16
    %v222 = vsel %vm221, %v218, %v220
    %v223 = vsel %vm221, %v216, %v218
    %v224 = vsel %vm221, %v214, %v216
    %v225 = vsel %vm221, %v220, %v214
    %v226 = vlaneseq
    %v227 = vshrl.u32 %v226, 7
    %v228 = vsub.s32 1, %v227
    %v229 = vrot.slane %v80, %v228
    %v230 = vlaneseq
    %v231 = vshrl.u32 %v230, 7
    %v232 = vsub.s32 1, %v231
    %v233 = vrot.slane %v81, %v232
    %v234 = vlaneseq
    %v235 = vshrl.u32 %v234, 7
    %v236 = vsub.s32 1, %v235
    %v237 = vrot.slane %v82, %v236
    %v238 = vlaneseq
    %v239 = vshrl.u32 %v238, 7
    %v240 = vsub.s32 1, %v239
    %v241 = vrot.slane %v83, %v240
    %v242 = vmul.f32 %v225, %v229
    %v243 = vmul.f32 %v224, %v233
    %v244 = vmul.f32 %v223, %v237
    %v245 = vmul.f32 %v222, %v241
    %v246 = vpack.c.bf16 %v242, %v242
    %v247 = vpack.c.bf16 %v243, %v243
    %v248 = vpack.c.bf16 %v244, %v244
    %v249 = vpack.c.bf16 %v245, %v245
    %vm250 = vcmask 31744
    %v252 = vsel %vm250, %v160, 0
    %vm254 = vcmask 1041408
    %v256 = vsel %vm254, %v246, 0
    %v259 = vsel %vm254, %v247, 0
    %v262 = vsel %vm254, %v248, 0
    %v265 = vsel %vm254, %v249, 0
    %267 = vmatprep.subr.bf16.mxu0 0
    %268 = vmatpush1.bf16.msra.mxu0 0
    %269 = vmatprep.subr.bf16.mxu0 0
    %270 = vmatpush1.bf16.msra.mxu0 0
    %271 = vmatprep.subr.bf16.mxu0 0
    %272 = vmatpush1.bf16.msra.mxu0 0
    %273 = vmatprep.subr.bf16.mxu0 0
    %274 = vmatpush1.bf16.msra.mxu0 0
    %275 = vmatprep.subr.bf16.mxu0 0
    %276 = vmatpush1.bf16.msra.mxu0 0
    %277 = vmatprep.subr.bf16.mxu0 0
    %278 = vmatpush1.bf16.msra.mxu0 0
    %279 = vmatprep.subr.bf16.mxu0 0
    %280 = vmatpush1.bf16.msra.mxu0 0
    %281 = vmatprep.subr.bf16.mxu0 %v259
    %282 = vmatpush1.bf16.msra.mxu0 %v256
    %283 = vmatprep.subr.bf16.mxu0 0
    %284 = vmatpush2.bf16.msra.mxu0 0
    %285 = vmatprep.subr.bf16.mxu0 0
    %286 = vmatpush2.bf16.msra.mxu0 0
    %287 = vmatprep.subr.bf16.mxu0 0
    %288 = vmatpush2.bf16.msra.mxu0 0
    %289 = vmatprep.subr.bf16.mxu0 0
    %290 = vmatpush2.bf16.msra.mxu0 0
    %291 = vmatprep.subr.bf16.mxu0 0
    %292 = vmatpush2.bf16.msra.mxu0 0
    %293 = vmatprep.subr.bf16.mxu0 0
    %294 = vmatpush2.bf16.msra.mxu0 0
    %295 = vmatprep.subr.bf16.mxu0 0
    %296 = vmatpush2.bf16.msra.mxu0 0
    %297 = vmatprep.subr.bf16.mxu0 0
    %298 = vmatpush2.bf16.msra.mxu0 0
    %299 = vmatprep.mubr.bf16.mxu0 0
    %300 = vmatmul.mubr.bf16.gmra.mxu0 %v252
    %v301 = vpop.f32.mrf.mxu0
    %v302 = vadd.f32 0.0, %v301
    %v303 = vpop.f32.mrf.mxu0
    %v304 = vadd.f32 0.0, %v303
    %v305 = vpop.f32.mrf.mxu0
    %v306 = vpop.f32.mrf.mxu0
    %307 = vdwg.mxu0
    %308 = vmatprep.subr.bf16.mxu0 0
    %309 = vmatpush1.bf16.msra.mxu0 0
    %310 = vmatprep.subr.bf16.mxu0 0
    %311 = vmatpush1.bf16.msra.mxu0 0
    %312 = vmatprep.subr.bf16.mxu0 0
    %313 = vmatpush1.bf16.msra.mxu0 0
    %314 = vmatprep.subr.bf16.mxu0 0
    %315 = vmatpush1.bf16.msra.mxu0 0
    %316 = vmatprep.subr.bf16.mxu0 0
    %317 = vmatpush1.bf16.msra.mxu0 0
    %318 = vmatprep.subr.bf16.mxu0 0
    %319 = vmatpush1.bf16.msra.mxu0 0
    %320 = vmatprep.subr.bf16.mxu0 0
    %321 = vmatpush1.bf16.msra.mxu0 0
    %322 = vmatprep.subr.bf16.mxu0 %v265
    %323 = vmatpush1.bf16.msra.mxu0 %v262
    %324 = vmatprep.subr.bf16.mxu0 0
    %325 = vmatpush2.bf16.msra.mxu0 0
    %326 = vmatprep.subr.bf16.mxu0 0
    %327 = vmatpush2.bf16.msra.mxu0 0
    %328 = vmatprep.subr.bf16.mxu0 0
    %329 = vmatpush2.bf16.msra.mxu0 0
    %330 = vmatprep.subr.bf16.mxu0 0
    %331 = vmatpush2.bf16.msra.mxu0 0
    %332 = vmatprep.subr.bf16.mxu0 0
    %333 = vmatpush2.bf16.msra.mxu0 0
    %334 = vmatprep.subr.bf16.mxu0 0
    %335 = vmatpush2.bf16.msra.mxu0 0
    %336 = vmatprep.subr.bf16.mxu0 0
    %337 = vmatpush2.bf16.msra.mxu0 0
    %338 = vmatprep.subr.bf16.mxu0 0
    %339 = vmatpush2.bf16.msra.mxu0 0
    %340 = vmatprep.mubr.bf16.mxu0 0
    %341 = vmatmul.mubr.bf16.gmra.mxu0 %v252
    %v342 = vpop.f32.mrf.mxu0
    %v343 = vadd.f32 0.0, %v342
    %v344 = vpop.f32.mrf.mxu0
    %v345 = vadd.f32 0.0, %v344
    %v346 = vpop.f32.mrf.mxu0
    %v347 = vpop.f32.mrf.mxu0
    %348 = vdwg.mxu0
    %v350 = vsel %vm250, %v159, 0
    %v353 = vsel %vm254, %v209, 0
    %v356 = vsel %vm254, %v210, 0
    %v359 = vsel %vm254, %v211, 0
    %v362 = vsel %vm254, %v212, 0
    %364 = vmatprep.subr.bf16.mxu0 0
    %365 = vmatpush1.bf16.msra.mxu0 0
    %366 = vmatprep.subr.bf16.mxu0 0
    %367 = vmatpush1.bf16.msra.mxu0 0
    %368 = vmatprep.subr.bf16.mxu0 0
    %369 = vmatpush1.bf16.msra.mxu0 0
    %370 = vmatprep.subr.bf16.mxu0 0
    %371 = vmatpush1.bf16.msra.mxu0 0
    %372 = vmatprep.subr.bf16.mxu0 0
    %373 = vmatpush1.bf16.msra.mxu0 0
    %374 = vmatprep.subr.bf16.mxu0 0
    %375 = vmatpush1.bf16.msra.mxu0 0
    %376 = vmatprep.subr.bf16.mxu0 0
    %377 = vmatpush1.bf16.msra.mxu0 0
    %378 = vmatprep.subr.bf16.mxu0 %v356
    %379 = vmatpush1.bf16.msra.mxu0 %v353
    %380 = vmatprep.subr.bf16.mxu0 0
    %381 = vmatpush2.bf16.msra.mxu0 0
    %382 = vmatprep.subr.bf16.mxu0 0
    %383 = vmatpush2.bf16.msra.mxu0 0
    %384 = vmatprep.subr.bf16.mxu0 0
    %385 = vmatpush2.bf16.msra.mxu0 0
    %386 = vmatprep.subr.bf16.mxu0 0
    %387 = vmatpush2.bf16.msra.mxu0 0
    %388 = vmatprep.subr.bf16.mxu0 0
    %389 = vmatpush2.bf16.msra.mxu0 0
    %390 = vmatprep.subr.bf16.mxu0 0
    %391 = vmatpush2.bf16.msra.mxu0 0
    %392 = vmatprep.subr.bf16.mxu0 0
    %393 = vmatpush2.bf16.msra.mxu0 0
    %394 = vmatprep.subr.bf16.mxu0 0
    %395 = vmatpush2.bf16.msra.mxu0 0
    %396 = vmatprep.mubr.bf16.mxu0 0
    %397 = vmatmul.mubr.bf16.gmra.mxu0 %v350
    %v398 = vpop.f32.mrf.mxu0
    %v399 = vadd.f32 %v302, %v398
    %v400 = vpop.f32.mrf.mxu0
    %v401 = vadd.f32 %v304, %v400
    %v402 = vpop.f32.mrf.mxu0
    %v403 = vpop.f32.mrf.mxu0
    %404 = vdwg.mxu0
    %405 = vmatprep.subr.bf16.mxu0 0
    %406 = vmatpush1.bf16.msra.mxu0 0
    %407 = vmatprep.subr.bf16.mxu0 0
    %408 = vmatpush1.bf16.msra.mxu0 0
    %409 = vmatprep.subr.bf16.mxu0 0
    %410 = vmatpush1.bf16.msra.mxu0 0
    %411 = vmatprep.subr.bf16.mxu0 0
    %412 = vmatpush1.bf16.msra.mxu0 0
    %413 = vmatprep.subr.bf16.mxu0 0
    %414 = vmatpush1.bf16.msra.mxu0 0
    %415 = vmatprep.subr.bf16.mxu0 0
    %416 = vmatpush1.bf16.msra.mxu0 0
    %417 = vmatprep.subr.bf16.mxu0 0
    %418 = vmatpush1.bf16.msra.mxu0 0
    %419 = vmatprep.subr.bf16.mxu0 %v362
    %420 = vmatpush1.bf16.msra.mxu0 %v359
    %421 = vmatprep.subr.bf16.mxu0 0
    %422 = vmatpush2.bf16.msra.mxu0 0
    %423 = vmatprep.subr.bf16.mxu0 0
    %424 = vmatpush2.bf16.msra.mxu0 0
    %425 = vmatprep.subr.bf16.mxu0 0
    %426 = vmatpush2.bf16.msra.mxu0 0
    %427 = vmatprep.subr.bf16.mxu0 0
    %428 = vmatpush2.bf16.msra.mxu0 0
    %429 = vmatprep.subr.bf16.mxu0 0
    %430 = vmatpush2.bf16.msra.mxu0 0
    %431 = vmatprep.subr.bf16.mxu0 0
    %432 = vmatpush2.bf16.msra.mxu0 0
    %433 = vmatprep.subr.bf16.mxu0 0
    %434 = vmatpush2.bf16.msra.mxu0 0
    %435 = vmatprep.subr.bf16.mxu0 0
    %436 = vmatpush2.bf16.msra.mxu0 0
    %437 = vmatprep.mubr.bf16.mxu0 0
    %438 = vmatmul.mubr.bf16.gmra.mxu0 %v350
    %v439 = vpop.f32.mrf.mxu0
    %v440 = vadd.f32 %v343, %v439
    %v441 = vpop.f32.mrf.mxu0
    %v442 = vadd.f32 %v345, %v441
    %v443 = vpop.f32.mrf.mxu0
    %v444 = vpop.f32.mrf.mxu0
    %445 = vdwg.mxu0
    %446 = vrot.lane.b32.xlu0 %v157, 15
    %v447 = vpop.permute.xlu0 %446
    %448 = vrot.lane.b32.xlu0 %v170, 15
    %v449 = vpop.permute.xlu0 %448
    %450 = vrot.lane.b32.xlu0 %v158, 15
    %v451 = vpop.permute.xlu0 %450
    %452 = vrot.lane.b32.xlu0 %v171, 15
    %v453 = vpop.permute.xlu0 %452
    %vm454 = vcmp.lt.s32.totalorder %v183, 15
    %v455 = vsel %vm454, %v451, %v453
    %v456 = vsel %vm454, %v449, %v451
    %v457 = vsel %vm454, %v447, %v449
    %v458 = vsel %vm454, %v453, %v447
    %v459 = vlaneseq
    %v460 = vshrl.u32 %v459, 7
    %v461 = vsub.s32 2, %v460
    %v462 = vrot.slane %v80, %v461
    %v463 = vlaneseq
    %v464 = vshrl.u32 %v463, 7
    %v465 = vsub.s32 2, %v464
    %v466 = vrot.slane %v81, %v465
    %v467 = vlaneseq
    %v468 = vshrl.u32 %v467, 7
    %v469 = vsub.s32 2, %v468
    %v470 = vrot.slane %v82, %v469
    %v471 = vlaneseq
    %v472 = vshrl.u32 %v471, 7
    %v473 = vsub.s32 2, %v472
    %v474 = vrot.slane %v83, %v473
    %v475 = vmul.f32 %v458, %v462
    %v476 = vmul.f32 %v457, %v466
    %v477 = vmul.f32 %v456, %v470
    %v478 = vmul.f32 %v455, %v474
    %v479 = vpack.c.bf16 %v475, %v475
    %v480 = vpack.c.bf16 %v476, %v476
    %v481 = vpack.c.bf16 %v477, %v477
    %v482 = vpack.c.bf16 %v478, %v478
    %v484 = vsel %vm250, %v161, 0
    %v487 = vsel %vm254, %v479, 0
    %v490 = vsel %vm254, %v480, 0
    %v493 = vsel %vm254, %v481, 0
    %v496 = vsel %vm254, %v482, 0
    %498 = vmatprep.subr.bf16.mxu0 0
    %499 = vmatpush1.bf16.msra.mxu0 0
    %500 = vmatprep.subr.bf16.mxu0 0
    %501 = vmatpush1.bf16.msra.mxu0 0
    %502 = vmatprep.subr.bf16.mxu0 0
    %503 = vmatpush1.bf16.msra.mxu0 0
    %504 = vmatprep.subr.bf16.mxu0 0
    %505 = vmatpush1.bf16.msra.mxu0 0
    %506 = vmatprep.subr.bf16.mxu0 0
    %507 = vmatpush1.bf16.msra.mxu0 0
    %508 = vmatprep.subr.bf16.mxu0 0
    %509 = vmatpush1.bf16.msra.mxu0 0
    %510 = vmatprep.subr.bf16.mxu0 0
    %511 = vmatpush1.bf16.msra.mxu0 0
    %512 = vmatprep.subr.bf16.mxu0 %v490
    %513 = vmatpush1.bf16.msra.mxu0 %v487
    %514 = vmatprep.subr.bf16.mxu0 0
    %515 = vmatpush2.bf16.msra.mxu0 0
    %516 = vmatprep.subr.bf16.mxu0 0
    %517 = vmatpush2.bf16.msra.mxu0 0
    %518 = vmatprep.subr.bf16.mxu0 0
    %519 = vmatpush2.bf16.msra.mxu0 0
    %520 = vmatprep.subr.bf16.mxu0 0
    %521 = vmatpush2.bf16.msra.mxu0 0
    %522 = vmatprep.subr.bf16.mxu0 0
    %523 = vmatpush2.bf16.msra.mxu0 0
    %524 = vmatprep.subr.bf16.mxu0 0
    %525 = vmatpush2.bf16.msra.mxu0 0
    %526 = vmatprep.subr.bf16.mxu0 0
    %527 = vmatpush2.bf16.msra.mxu0 0
    %528 = vmatprep.subr.bf16.mxu0 0
    %529 = vmatpush2.bf16.msra.mxu0 0
    %530 = vmatprep.mubr.bf16.mxu0 0
    %531 = vmatmul.mubr.bf16.gmra.mxu0 %v484
    %v532 = vpop.f32.mrf.mxu0
    %v533 = vadd.f32 0.0, %v532
    %v534 = vpop.f32.mrf.mxu0
    %v535 = vadd.f32 0.0, %v534
    %v536 = vpop.f32.mrf.mxu0
    %v537 = vpop.f32.mrf.mxu0
    %538 = vdwg.mxu0
    %539 = vmatprep.subr.bf16.mxu0 0
    %540 = vmatpush1.bf16.msra.mxu0 0
    %541 = vmatprep.subr.bf16.mxu0 0
    %542 = vmatpush1.bf16.msra.mxu0 0
    %543 = vmatprep.subr.bf16.mxu0 0
    %544 = vmatpush1.bf16.msra.mxu0 0
    %545 = vmatprep.subr.bf16.mxu0 0
    %546 = vmatpush1.bf16.msra.mxu0 0
    %547 = vmatprep.subr.bf16.mxu0 0
    %548 = vmatpush1.bf16.msra.mxu0 0
    %549 = vmatprep.subr.bf16.mxu0 0
    %550 = vmatpush1.bf16.msra.mxu0 0
    %551 = vmatprep.subr.bf16.mxu0 0
    %552 = vmatpush1.bf16.msra.mxu0 0
    %553 = vmatprep.subr.bf16.mxu0 %v496
    %554 = vmatpush1.bf16.msra.mxu0 %v493
    %555 = vmatprep.subr.bf16.mxu0 0
    %556 = vmatpush2.bf16.msra.mxu0 0
    %557 = vmatprep.subr.bf16.mxu0 0
    %558 = vmatpush2.bf16.msra.mxu0 0
    %559 = vmatprep.subr.bf16.mxu0 0
    %560 = vmatpush2.bf16.msra.mxu0 0
    %561 = vmatprep.subr.bf16.mxu0 0
    %562 = vmatpush2.bf16.msra.mxu0 0
    %563 = vmatprep.subr.bf16.mxu0 0
    %564 = vmatpush2.bf16.msra.mxu0 0
    %565 = vmatprep.subr.bf16.mxu0 0
    %566 = vmatpush2.bf16.msra.mxu0 0
    %567 = vmatprep.subr.bf16.mxu0 0
    %568 = vmatpush2.bf16.msra.mxu0 0
    %569 = vmatprep.subr.bf16.mxu0 0
    %570 = vmatpush2.bf16.msra.mxu0 0
    %571 = vmatprep.mubr.bf16.mxu0 0
    %572 = vmatmul.mubr.bf16.gmra.mxu0 %v484
    %v573 = vpop.f32.mrf.mxu0
    %v574 = vadd.f32 0.0, %v573
    %v575 = vpop.f32.mrf.mxu0
    %v576 = vadd.f32 0.0, %v575
    %v577 = vpop.f32.mrf.mxu0
    %v578 = vpop.f32.mrf.mxu0
    %579 = vdwg.mxu0
    %v580 = vadd.f32 %v399, %v533
    %v581 = vadd.f32 %v401, %v535
    %v582 = vadd.f32 %v440, %v574
    %v583 = vadd.f32 %v442, %v576
    %584 = vrot.lane.b32.xlu0 %v157, 1
    %v585 = vpop.permute.xlu0 %584
    %586 = vrot.lane.b32.xlu0 %v170, 1
    %v587 = vpop.permute.xlu0 %586
    %588 = vrot.lane.b32.xlu0 %v158, 1
    %v589 = vpop.permute.xlu0 %588
    %590 = vrot.lane.b32.xlu0 %v171, 1
    %v591 = vpop.permute.xlu0 %590
    %vm592 = vcmp.lt.s32.totalorder %v183, 1
    %v593 = vsel %vm592, %v589, %v591
    %v594 = vsel %vm592, %v587, %v589
    %v595 = vsel %vm592, %v585, %v587
    %v596 = vsel %vm592, %v591, %v585
    %v597 = vlaneseq
    %v598 = vshrl.u32 %v597, 7
    %v599 = vsub.s32 3, %v598
    %v600 = vrot.slane %v80, %v599
    %v601 = vlaneseq
    %v602 = vshrl.u32 %v601, 7
    %v603 = vsub.s32 3, %v602
    %v604 = vrot.slane %v81, %v603
    %v605 = vlaneseq
    %v606 = vshrl.u32 %v605, 7
    %v607 = vsub.s32 3, %v606
    %v608 = vrot.slane %v82, %v607
    %v609 = vlaneseq
    %v610 = vshrl.u32 %v609, 7
    %v611 = vsub.s32 3, %v610
    %v612 = vrot.slane %v83, %v611
    %v613 = vmul.f32 %v596, %v600
    %v614 = vmul.f32 %v595, %v604
    %v615 = vmul.f32 %v594, %v608
    %v616 = vmul.f32 %v593, %v612
    %v617 = vpack.c.bf16 %v613, %v613
    %v618 = vpack.c.bf16 %v614, %v614
    %v619 = vpack.c.bf16 %v615, %v615
    %v620 = vpack.c.bf16 %v616, %v616
    %v622 = vsel %vm250, %v162, 0
    %v625 = vsel %vm254, %v617, 0
    %v628 = vsel %vm254, %v618, 0
    %v631 = vsel %vm254, %v619, 0
    %v634 = vsel %vm254, %v620, 0
    %636 = vmatprep.subr.bf16.mxu0 0
    %637 = vmatpush1.bf16.msra.mxu0 0
    %638 = vmatprep.subr.bf16.mxu0 0
    %639 = vmatpush1.bf16.msra.mxu0 0
    %640 = vmatprep.subr.bf16.mxu0 0
    %641 = vmatpush1.bf16.msra.mxu0 0
    %642 = vmatprep.subr.bf16.mxu0 0
    %643 = vmatpush1.bf16.msra.mxu0 0
    %644 = vmatprep.subr.bf16.mxu0 0
    %645 = vmatpush1.bf16.msra.mxu0 0
    %646 = vmatprep.subr.bf16.mxu0 0
    %647 = vmatpush1.bf16.msra.mxu0 0
    %648 = vmatprep.subr.bf16.mxu0 0
    %649 = vmatpush1.bf16.msra.mxu0 0
    %650 = vmatprep.subr.bf16.mxu0 %v628
    %651 = vmatpush1.bf16.msra.mxu0 %v625
    %652 = vmatprep.subr.bf16.mxu0 0
    %653 = vmatpush2.bf16.msra.mxu0 0
    %654 = vmatprep.subr.bf16.mxu0 0
    %655 = vmatpush2.bf16.msra.mxu0 0
    %656 = vmatprep.subr.bf16.mxu0 0
    %657 = vmatpush2.bf16.msra.mxu0 0
    %658 = vmatprep.subr.bf16.mxu0 0
    %659 = vmatpush2.bf16.msra.mxu0 0
    %660 = vmatprep.subr.bf16.mxu0 0
    %661 = vmatpush2.bf16.msra.mxu0 0
    %662 = vmatprep.subr.bf16.mxu0 0
    %663 = vmatpush2.bf16.msra.mxu0 0
    %664 = vmatprep.subr.bf16.mxu0 0
    %665 = vmatpush2.bf16.msra.mxu0 0
    %666 = vmatprep.subr.bf16.mxu0 0
    %667 = vmatpush2.bf16.msra.mxu0 0
    %668 = vmatprep.mubr.bf16.mxu0 0
    %669 = vmatmul.mubr.bf16.gmra.mxu0 %v622
    %v670 = vpop.f32.mrf.mxu0
    %v671 = vadd.f32 0.0, %v670
    %v672 = vpop.f32.mrf.mxu0
    %v673 = vadd.f32 0.0, %v672
    %v674 = vpop.f32.mrf.mxu0
    %v675 = vpop.f32.mrf.mxu0
    %676 = vdwg.mxu0
    %677 = vmatprep.subr.bf16.mxu0 0
    %678 = vmatpush1.bf16.msra.mxu0 0
    %679 = vmatprep.subr.bf16.mxu0 0
    %680 = vmatpush1.bf16.msra.mxu0 0
    %681 = vmatprep.subr.bf16.mxu0 0
    %682 = vmatpush1.bf16.msra.mxu0 0
    %683 = vmatprep.subr.bf16.mxu0 0
    %684 = vmatpush1.bf16.msra.mxu0 0
    %685 = vmatprep.subr.bf16.mxu0 0
    %686 = vmatpush1.bf16.msra.mxu0 0
    %687 = vmatprep.subr.bf16.mxu0 0
    %688 = vmatpush1.bf16.msra.mxu0 0
    %689 = vmatprep.subr.bf16.mxu0 0
    %690 = vmatpush1.bf16.msra.mxu0 0
    %691 = vmatprep.subr.bf16.mxu0 %v634
    %692 = vmatpush1.bf16.msra.mxu0 %v631
    %693 = vmatprep.subr.bf16.mxu0 0
    %694 = vmatpush2.bf16.msra.mxu0 0
    %695 = vmatprep.subr.bf16.mxu0 0
    %696 = vmatpush2.bf16.msra.mxu0 0
    %697 = vmatprep.subr.bf16.mxu0 0
    %698 = vmatpush2.bf16.msra.mxu0 0
    %699 = vmatprep.subr.bf16.mxu0 0
    %700 = vmatpush2.bf16.msra.mxu0 0
    %701 = vmatprep.subr.bf16.mxu0 0
    %702 = vmatpush2.bf16.msra.mxu0 0
    %703 = vmatprep.subr.bf16.mxu0 0
    %704 = vmatpush2.bf16.msra.mxu0 0
    %705 = vmatprep.subr.bf16.mxu0 0
    %706 = vmatpush2.bf16.msra.mxu0 0
    %707 = vmatprep.subr.bf16.mxu0 0
    %708 = vmatpush2.bf16.msra.mxu0 0
    %709 = vmatprep.mubr.bf16.mxu0 0
    %710 = vmatmul.mubr.bf16.gmra.mxu0 %v622
    %v711 = vpop.f32.mrf.mxu0
    %v712 = vadd.f32 0.0, %v711
    %v713 = vpop.f32.mrf.mxu0
    %v714 = vadd.f32 0.0, %v713
    %v715 = vpop.f32.mrf.mxu0
    %v716 = vpop.f32.mrf.mxu0
    %717 = vdwg.mxu0
    %v718 = vadd.f32 %v580, %v671
    %v719 = vadd.f32 %v581, %v673
    %v720 = vadd.f32 %v582, %v712
    %v721 = vadd.f32 %v583, %v714
    %v722 = vpack.c.bf16 %v157, %v157
    %v723 = vpack.c.bf16 %v170, %v170
    %v724 = vpack.c.bf16 %v158, %v158
    %v725 = vpack.c.bf16 %v171, %v171
    %v727 = vsel %vm250, %v163, 0
    %v730 = vsel %vm254, %v722, 0
    %v733 = vsel %vm254, %v723, 0
    %v736 = vsel %vm254, %v724, 0
    %v739 = vsel %vm254, %v725, 0
    %741 = vmatprep.subr.bf16.mxu0 0
    %742 = vmatpush1.bf16.msra.mxu0 0
    %743 = vmatprep.subr.bf16.mxu0 0
    %744 = vmatpush1.bf16.msra.mxu0 0
    %745 = vmatprep.subr.bf16.mxu0 0
    %746 = vmatpush1.bf16.msra.mxu0 0
    %747 = vmatprep.subr.bf16.mxu0 0
    %748 = vmatpush1.bf16.msra.mxu0 0
    %749 = vmatprep.subr.bf16.mxu0 0
    %750 = vmatpush1.bf16.msra.mxu0 0
    %751 = vmatprep.subr.bf16.mxu0 0
    %752 = vmatpush1.bf16.msra.mxu0 0
    %753 = vmatprep.subr.bf16.mxu0 0
    %754 = vmatpush1.bf16.msra.mxu0 0
    %755 = vmatprep.subr.bf16.mxu0 %v733
    %756 = vmatpush1.bf16.msra.mxu0 %v730
    %757 = vmatprep.subr.bf16.mxu0 0
    %758 = vmatpush2.bf16.msra.mxu0 0
    %759 = vmatprep.subr.bf16.mxu0 0
    %760 = vmatpush2.bf16.msra.mxu0 0
    %761 = vmatprep.subr.bf16.mxu0 0
    %762 = vmatpush2.bf16.msra.mxu0 0
    %763 = vmatprep.subr.bf16.mxu0 0
    %764 = vmatpush2.bf16.msra.mxu0 0
    %765 = vmatprep.subr.bf16.mxu0 0
    %766 = vmatpush2.bf16.msra.mxu0 0
    %767 = vmatprep.subr.bf16.mxu0 0
    %768 = vmatpush2.bf16.msra.mxu0 0
    %769 = vmatprep.subr.bf16.mxu0 0
    %770 = vmatpush2.bf16.msra.mxu0 0
    %771 = vmatprep.subr.bf16.mxu0 0
    %772 = vmatpush2.bf16.msra.mxu0 0
    %773 = vmatprep.mubr.bf16.mxu0 0
    %774 = vmatmul.mubr.bf16.gmra.mxu0 %v727
    %v775 = vpop.f32.mrf.mxu0
    %v776 = vadd.f32 0.0, %v775
    %v777 = vpop.f32.mrf.mxu0
    %v778 = vadd.f32 0.0, %v777
    %v779 = vpop.f32.mrf.mxu0
    %v780 = vpop.f32.mrf.mxu0
    %781 = vdwg.mxu0
    %782 = vmatprep.subr.bf16.mxu0 0
    %783 = vmatpush1.bf16.msra.mxu0 0
    %784 = vmatprep.subr.bf16.mxu0 0
    %785 = vmatpush1.bf16.msra.mxu0 0
    %786 = vmatprep.subr.bf16.mxu0 0
    %787 = vmatpush1.bf16.msra.mxu0 0
    %788 = vmatprep.subr.bf16.mxu0 0
    %789 = vmatpush1.bf16.msra.mxu0 0
    %790 = vmatprep.subr.bf16.mxu0 0
    %791 = vmatpush1.bf16.msra.mxu0 0
    %792 = vmatprep.subr.bf16.mxu0 0
    %793 = vmatpush1.bf16.msra.mxu0 0
    %794 = vmatprep.subr.bf16.mxu0 0
    %795 = vmatpush1.bf16.msra.mxu0 0
    %796 = vmatprep.subr.bf16.mxu0 %v739
    %797 = vmatpush1.bf16.msra.mxu0 %v736
    %798 = vmatprep.subr.bf16.mxu0 0
    %799 = vmatpush2.bf16.msra.mxu0 0
    %800 = vmatprep.subr.bf16.mxu0 0
    %801 = vmatpush2.bf16.msra.mxu0 0
    %802 = vmatprep.subr.bf16.mxu0 0
    %803 = vmatpush2.bf16.msra.mxu0 0
    %804 = vmatprep.subr.bf16.mxu0 0
    %805 = vmatpush2.bf16.msra.mxu0 0
    %806 = vmatprep.subr.bf16.mxu0 0
    %807 = vmatpush2.bf16.msra.mxu0 0
    %808 = vmatprep.subr.bf16.mxu0 0
    %809 = vmatpush2.bf16.msra.mxu0 0
    %810 = vmatprep.subr.bf16.mxu0 0
    %811 = vmatpush2.bf16.msra.mxu0 0
    %812 = vmatprep.subr.bf16.mxu0 0
    %813 = vmatpush2.bf16.msra.mxu0 0
    %814 = vmatprep.mubr.bf16.mxu0 0
    %815 = vmatmul.mubr.bf16.gmra.mxu0 %v727
    %v816 = vpop.f32.mrf.mxu0
    %v817 = vadd.f32 0.0, %v816
    %v818 = vpop.f32.mrf.mxu0
    %v819 = vadd.f32 0.0, %v818
    %v820 = vpop.f32.mrf.mxu0
    %v821 = vpop.f32.mrf.mxu0
    %822 = vdwg.mxu0
    %v823 = vadd.f32 %v718, %v776
    %v824 = vadd.f32 %v719, %v778
    %v825 = vadd.f32 %v720, %v817
    %v826 = vadd.f32 %v721, %v819
    %827 = vrot.lane.b32.xlu0 %v157, 127
    %v828 = vpop.permute.xlu0 %827
    %829 = vrot.lane.b32.xlu0 %v170, 127
    %v830 = vpop.permute.xlu0 %829
    %831 = vrot.lane.b32.xlu0 %v158, 127
    %v832 = vpop.permute.xlu0 %831
    %833 = vrot.lane.b32.xlu0 %v171, 127
    %v834 = vpop.permute.xlu0 %833
    %vm835 = vcmp.lt.s32.totalorder %v183, 127
    %v836 = vsel %vm835, %v832, %v834
    %v837 = vsel %vm835, %v830, %v832
    %v838 = vsel %vm835, %v828, %v830
    %v839 = vsel %vm835, %v834, %v828
    %v840 = vlaneseq
    %v841 = vshrl.u32 %v840, 7
    %v842 = vsub.s32 5, %v841
    %v843 = vrot.slane %v80, %v842
    %v844 = vlaneseq
    %v845 = vshrl.u32 %v844, 7
    %v846 = vsub.s32 5, %v845
    %v847 = vrot.slane %v81, %v846
    %v848 = vlaneseq
    %v849 = vshrl.u32 %v848, 7
    %v850 = vsub.s32 5, %v849
    %v851 = vrot.slane %v82, %v850
    %v852 = vlaneseq
    %v853 = vshrl.u32 %v852, 7
    %v854 = vsub.s32 5, %v853
    %v855 = vrot.slane %v83, %v854
    %v856 = vmul.f32 %v838, %v843
    %v857 = vmul.f32 %v837, %v847
    %v858 = vmul.f32 %v836, %v851
    %v859 = vmul.f32 %v839, %v855
    %v860 = vpack.c.bf16 %v856, %v856
    %v861 = vpack.c.bf16 %v857, %v857
    %v862 = vpack.c.bf16 %v858, %v858
    %v863 = vpack.c.bf16 %v859, %v859
    %v865 = vsel %vm250, %v164, 0
    %v868 = vsel %vm254, %v860, 0
    %v871 = vsel %vm254, %v861, 0
    %v874 = vsel %vm254, %v862, 0
    %v877 = vsel %vm254, %v863, 0
    %879 = vmatprep.subr.bf16.mxu0 0
    %880 = vmatpush1.bf16.msra.mxu0 0
    %881 = vmatprep.subr.bf16.mxu0 0
    %882 = vmatpush1.bf16.msra.mxu0 0
    %883 = vmatprep.subr.bf16.mxu0 0
    %884 = vmatpush1.bf16.msra.mxu0 0
    %885 = vmatprep.subr.bf16.mxu0 0
    %886 = vmatpush1.bf16.msra.mxu0 0
    %887 = vmatprep.subr.bf16.mxu0 0
    %888 = vmatpush1.bf16.msra.mxu0 0
    %889 = vmatprep.subr.bf16.mxu0 0
    %890 = vmatpush1.bf16.msra.mxu0 0
    %891 = vmatprep.subr.bf16.mxu0 0
    %892 = vmatpush1.bf16.msra.mxu0 0
    %893 = vmatprep.subr.bf16.mxu0 %v871
    %894 = vmatpush1.bf16.msra.mxu0 %v868
    %895 = vmatprep.subr.bf16.mxu0 0
    %896 = vmatpush2.bf16.msra.mxu0 0
    %897 = vmatprep.subr.bf16.mxu0 0
    %898 = vmatpush2.bf16.msra.mxu0 0
    %899 = vmatprep.subr.bf16.mxu0 0
    %900 = vmatpush2.bf16.msra.mxu0 0
    %901 = vmatprep.subr.bf16.mxu0 0
    %902 = vmatpush2.bf16.msra.mxu0 0
    %903 = vmatprep.subr.bf16.mxu0 0
    %904 = vmatpush2.bf16.msra.mxu0 0
    %905 = vmatprep.subr.bf16.mxu0 0
    %906 = vmatpush2.bf16.msra.mxu0 0
    %907 = vmatprep.subr.bf16.mxu0 0
    %908 = vmatpush2.bf16.msra.mxu0 0
    %909 = vmatprep.subr.bf16.mxu0 0
    %910 = vmatpush2.bf16.msra.mxu0 0
    %911 = vmatprep.mubr.bf16.mxu0 0
    %912 = vmatmul.mubr.bf16.gmra.mxu0 %v865
    %v913 = vpop.f32.mrf.mxu0
    %v914 = vadd.f32 0.0, %v913
    %v915 = vpop.f32.mrf.mxu0
    %v916 = vadd.f32 0.0, %v915
    %v917 = vpop.f32.mrf.mxu0
    %v918 = vpop.f32.mrf.mxu0
    %919 = vdwg.mxu0
    %920 = vmatprep.subr.bf16.mxu0 0
    %921 = vmatpush1.bf16.msra.mxu0 0
    %922 = vmatprep.subr.bf16.mxu0 0
    %923 = vmatpush1.bf16.msra.mxu0 0
    %924 = vmatprep.subr.bf16.mxu0 0
    %925 = vmatpush1.bf16.msra.mxu0 0
    %926 = vmatprep.subr.bf16.mxu0 0
    %927 = vmatpush1.bf16.msra.mxu0 0
    %928 = vmatprep.subr.bf16.mxu0 0
    %929 = vmatpush1.bf16.msra.mxu0 0
    %930 = vmatprep.subr.bf16.mxu0 0
    %931 = vmatpush1.bf16.msra.mxu0 0
    %932 = vmatprep.subr.bf16.mxu0 0
    %933 = vmatpush1.bf16.msra.mxu0 0
    %934 = vmatprep.subr.bf16.mxu0 %v877
    %935 = vmatpush1.bf16.msra.mxu0 %v874
    %936 = vmatprep.subr.bf16.mxu0 0
    %937 = vmatpush2.bf16.msra.mxu0 0
    %938 = vmatprep.subr.bf16.mxu0 0
    %939 = vmatpush2.bf16.msra.mxu0 0
    %940 = vmatprep.subr.bf16.mxu0 0
    %941 = vmatpush2.bf16.msra.mxu0 0
    %942 = vmatprep.subr.bf16.mxu0 0
    %943 = vmatpush2.bf16.msra.mxu0 0
    %944 = vmatprep.subr.bf16.mxu0 0
    %945 = vmatpush2.bf16.msra.mxu0 0
    %946 = vmatprep.subr.bf16.mxu0 0
    %947 = vmatpush2.bf16.msra.mxu0 0
    %948 = vmatprep.subr.bf16.mxu0 0
    %949 = vmatpush2.bf16.msra.mxu0 0
    %950 = vmatprep.subr.bf16.mxu0 0
    %951 = vmatpush2.bf16.msra.mxu0 0
    %952 = vmatprep.mubr.bf16.mxu0 0
    %953 = vmatmul.mubr.bf16.gmra.mxu0 %v865
    %v954 = vpop.f32.mrf.mxu0
    %v955 = vadd.f32 0.0, %v954
    %v956 = vpop.f32.mrf.mxu0
    %v957 = vadd.f32 0.0, %v956
    %v958 = vpop.f32.mrf.mxu0
    %v959 = vpop.f32.mrf.mxu0
    %960 = vdwg.mxu0
    %v961 = vadd.f32 %v823, %v914
    %v962 = vadd.f32 %v824, %v916
    %v963 = vadd.f32 %v825, %v955
    %v964 = vadd.f32 %v826, %v957
    %965 = vrot.lane.b32.xlu0 %v157, 113
    %v966 = vpop.permute.xlu0 %965
    %967 = vrot.lane.b32.xlu0 %v170, 113
    %v968 = vpop.permute.xlu0 %967
    %969 = vrot.lane.b32.xlu0 %v158, 113
    %v970 = vpop.permute.xlu0 %969
    %971 = vrot.lane.b32.xlu0 %v171, 113
    %v972 = vpop.permute.xlu0 %971
    %vm973 = vcmp.lt.s32.totalorder %v183, 113
    %v974 = vsel %vm973, %v970, %v972
    %v975 = vsel %vm973, %v968, %v970
    %v976 = vsel %vm973, %v966, %v968
    %v977 = vsel %vm973, %v972, %v966
    %v978 = vlaneseq
    %v979 = vshrl.u32 %v978, 7
    %v980 = vsub.s32 6, %v979
    %v981 = vrot.slane %v80, %v980
    %v982 = vlaneseq
    %v983 = vshrl.u32 %v982, 7
    %v984 = vsub.s32 6, %v983
    %v985 = vrot.slane %v81, %v984
    %v986 = vlaneseq
    %v987 = vshrl.u32 %v986, 7
    %v988 = vsub.s32 6, %v987
    %v989 = vrot.slane %v82, %v988
    %v990 = vlaneseq
    %v991 = vshrl.u32 %v990, 7
    %v992 = vsub.s32 6, %v991
    %v993 = vrot.slane %v83, %v992
    %v994 = vmul.f32 %v976, %v981
    %v995 = vmul.f32 %v975, %v985
    %v996 = vmul.f32 %v974, %v989
    %v997 = vmul.f32 %v977, %v993
    %v998 = vpack.c.bf16 %v994, %v994
    %v999 = vpack.c.bf16 %v995, %v995
    %v1000 = vpack.c.bf16 %v996, %v996
    %v1001 = vpack.c.bf16 %v997, %v997
    %v1003 = vsel %vm250, %v165, 0
    %v1006 = vsel %vm254, %v998, 0
    %v1009 = vsel %vm254, %v999, 0
    %v1012 = vsel %vm254, %v1000, 0
    %v1015 = vsel %vm254, %v1001, 0
    %1017 = vmatprep.subr.bf16.mxu0 0
    %1018 = vmatpush1.bf16.msra.mxu0 0
    %1019 = vmatprep.subr.bf16.mxu0 0
    %1020 = vmatpush1.bf16.msra.mxu0 0
    %1021 = vmatprep.subr.bf16.mxu0 0
    %1022 = vmatpush1.bf16.msra.mxu0 0
    %1023 = vmatprep.subr.bf16.mxu0 0
    %1024 = vmatpush1.bf16.msra.mxu0 0
    %1025 = vmatprep.subr.bf16.mxu0 0
    %1026 = vmatpush1.bf16.msra.mxu0 0
    %1027 = vmatprep.subr.bf16.mxu0 0
    %1028 = vmatpush1.bf16.msra.mxu0 0
    %1029 = vmatprep.subr.bf16.mxu0 0
    %1030 = vmatpush1.bf16.msra.mxu0 0
    %1031 = vmatprep.subr.bf16.mxu0 %v1009
    %1032 = vmatpush1.bf16.msra.mxu0 %v1006
    %1033 = vmatprep.subr.bf16.mxu0 0
    %1034 = vmatpush2.bf16.msra.mxu0 0
    %1035 = vmatprep.subr.bf16.mxu0 0
    %1036 = vmatpush2.bf16.msra.mxu0 0
    %1037 = vmatprep.subr.bf16.mxu0 0
    %1038 = vmatpush2.bf16.msra.mxu0 0
    %1039 = vmatprep.subr.bf16.mxu0 0
    %1040 = vmatpush2.bf16.msra.mxu0 0
    %1041 = vmatprep.subr.bf16.mxu0 0
    %1042 = vmatpush2.bf16.msra.mxu0 0
    %1043 = vmatprep.subr.bf16.mxu0 0
    %1044 = vmatpush2.bf16.msra.mxu0 0
    %1045 = vmatprep.subr.bf16.mxu0 0
    %1046 = vmatpush2.bf16.msra.mxu0 0
    %1047 = vmatprep.subr.bf16.mxu0 0
    %1048 = vmatpush2.bf16.msra.mxu0 0
    %1049 = vmatprep.mubr.bf16.mxu0 0
    %1050 = vmatmul.mubr.bf16.gmra.mxu0 %v1003
    %v1051 = vpop.f32.mrf.mxu0
    %v1052 = vadd.f32 0.0, %v1051
    %v1053 = vpop.f32.mrf.mxu0
    %v1054 = vadd.f32 0.0, %v1053
    %v1055 = vpop.f32.mrf.mxu0
    %v1056 = vpop.f32.mrf.mxu0
    %1057 = vdwg.mxu0
    %1058 = vmatprep.subr.bf16.mxu0 0
    %1059 = vmatpush1.bf16.msra.mxu0 0
    %1060 = vmatprep.subr.bf16.mxu0 0
    %1061 = vmatpush1.bf16.msra.mxu0 0
    %1062 = vmatprep.subr.bf16.mxu0 0
    %1063 = vmatpush1.bf16.msra.mxu0 0
    %1064 = vmatprep.subr.bf16.mxu0 0
    %1065 = vmatpush1.bf16.msra.mxu0 0
    %1066 = vmatprep.subr.bf16.mxu0 0
    %1067 = vmatpush1.bf16.msra.mxu0 0
    %1068 = vmatprep.subr.bf16.mxu0 0
    %1069 = vmatpush1.bf16.msra.mxu0 0
    %1070 = vmatprep.subr.bf16.mxu0 0
    %1071 = vmatpush1.bf16.msra.mxu0 0
    %1072 = vmatprep.subr.bf16.mxu0 %v1015
    %1073 = vmatpush1.bf16.msra.mxu0 %v1012
    %1074 = vmatprep.subr.bf16.mxu0 0
    %1075 = vmatpush2.bf16.msra.mxu0 0
    %1076 = vmatprep.subr.bf16.mxu0 0
    %1077 = vmatpush2.bf16.msra.mxu0 0
    %1078 = vmatprep.subr.bf16.mxu0 0
    %1079 = vmatpush2.bf16.msra.mxu0 0
    %1080 = vmatprep.subr.bf16.mxu0 0
    %1081 = vmatpush2.bf16.msra.mxu0 0
    %1082 = vmatprep.subr.bf16.mxu0 0
    %1083 = vmatpush2.bf16.msra.mxu0 0
    %1084 = vmatprep.subr.bf16.mxu0 0
    %1085 = vmatpush2.bf16.msra.mxu0 0
    %1086 = vmatprep.subr.bf16.mxu0 0
    %1087 = vmatpush2.bf16.msra.mxu0 0
    %1088 = vmatprep.subr.bf16.mxu0 0
    %1089 = vmatpush2.bf16.msra.mxu0 0
    %1090 = vmatprep.mubr.bf16.mxu0 0
    %1091 = vmatmul.mubr.bf16.gmra.mxu0 %v1003
    %v1092 = vpop.f32.mrf.mxu0
    %v1093 = vadd.f32 0.0, %v1092
    %v1094 = vpop.f32.mrf.mxu0
    %v1095 = vadd.f32 0.0, %v1094
    %v1096 = vpop.f32.mrf.mxu0
    %v1097 = vpop.f32.mrf.mxu0
    %1098 = vdwg.mxu0
    %v1099 = vadd.f32 %v961, %v1052
    %v1100 = vadd.f32 %v962, %v1054
    %v1101 = vadd.f32 %v963, %v1093
    %v1102 = vadd.f32 %v964, %v1095
    %1103 = vrot.lane.b32.xlu0 %v157, 112
    %v1104 = vpop.permute.xlu0 %1103
    %1105 = vrot.lane.b32.xlu0 %v170, 112
    %v1106 = vpop.permute.xlu0 %1105
    %1107 = vrot.lane.b32.xlu0 %v158, 112
    %v1108 = vpop.permute.xlu0 %1107
    %1109 = vrot.lane.b32.xlu0 %v171, 112
    %v1110 = vpop.permute.xlu0 %1109
    %vm1111 = vcmp.lt.s32.totalorder %v183, 112
    %v1112 = vsel %vm1111, %v1108, %v1110
    %v1113 = vsel %vm1111, %v1106, %v1108
    %v1114 = vsel %vm1111, %v1104, %v1106
    %v1115 = vsel %vm1111, %v1110, %v1104
    %v1116 = vlaneseq
    %v1117 = vshrl.u32 %v1116, 7
    %v1118 = vsub.s32 7, %v1117
    %v1119 = vrot.slane %v80, %v1118
    %v1120 = vlaneseq
    %v1121 = vshrl.u32 %v1120, 7
    %v1122 = vsub.s32 7, %v1121
    %v1123 = vrot.slane %v81, %v1122
    %v1124 = vlaneseq
    %v1125 = vshrl.u32 %v1124, 7
    %v1126 = vsub.s32 7, %v1125
    %v1127 = vrot.slane %v82, %v1126
    %v1128 = vlaneseq
    %v1129 = vshrl.u32 %v1128, 7
    %v1130 = vsub.s32 7, %v1129
    %v1131 = vrot.slane %v83, %v1130
    %v1132 = vmul.f32 %v1114, %v1119
    %v1133 = vmul.f32 %v1113, %v1123
    %v1134 = vmul.f32 %v1112, %v1127
    %v1135 = vmul.f32 %v1115, %v1131
    %v1136 = vpack.c.bf16 %v1132, %v1132
    %v1137 = vpack.c.bf16 %v1133, %v1133
    %v1138 = vpack.c.bf16 %v1134, %v1134
    %v1139 = vpack.c.bf16 %v1135, %v1135
    %v1141 = vsel %vm250, %v166, 0
    %v1144 = vsel %vm254, %v1136, 0
    %v1147 = vsel %vm254, %v1137, 0
    %v1150 = vsel %vm254, %v1138, 0
    %v1153 = vsel %vm254, %v1139, 0
    %1155 = vmatprep.subr.bf16.mxu0 0
    %1156 = vmatpush1.bf16.msra.mxu0 0
    %1157 = vmatprep.subr.bf16.mxu0 0
    %1158 = vmatpush1.bf16.msra.mxu0 0
    %1159 = vmatprep.subr.bf16.mxu0 0
    %1160 = vmatpush1.bf16.msra.mxu0 0
    %1161 = vmatprep.subr.bf16.mxu0 0
    %1162 = vmatpush1.bf16.msra.mxu0 0
    %1163 = vmatprep.subr.bf16.mxu0 0
    %1164 = vmatpush1.bf16.msra.mxu0 0
    %1165 = vmatprep.subr.bf16.mxu0 0
    %1166 = vmatpush1.bf16.msra.mxu0 0
    %1167 = vmatprep.subr.bf16.mxu0 0
    %1168 = vmatpush1.bf16.msra.mxu0 0
    %1169 = vmatprep.subr.bf16.mxu0 %v1147
    %1170 = vmatpush1.bf16.msra.mxu0 %v1144
    %1171 = vmatprep.subr.bf16.mxu0 0
    %1172 = vmatpush2.bf16.msra.mxu0 0
    %1173 = vmatprep.subr.bf16.mxu0 0
    %1174 = vmatpush2.bf16.msra.mxu0 0
    %1175 = vmatprep.subr.bf16.mxu0 0
    %1176 = vmatpush2.bf16.msra.mxu0 0
    %1177 = vmatprep.subr.bf16.mxu0 0
    %1178 = vmatpush2.bf16.msra.mxu0 0
    %1179 = vmatprep.subr.bf16.mxu0 0
    %1180 = vmatpush2.bf16.msra.mxu0 0
    %1181 = vmatprep.subr.bf16.mxu0 0
    %1182 = vmatpush2.bf16.msra.mxu0 0
    %1183 = vmatprep.subr.bf16.mxu0 0
    %1184 = vmatpush2.bf16.msra.mxu0 0
    %1185 = vmatprep.subr.bf16.mxu0 0
    %1186 = vmatpush2.bf16.msra.mxu0 0
    %1187 = vmatprep.mubr.bf16.mxu0 0
    %1188 = vmatmul.mubr.bf16.gmra.mxu0 %v1141
    %v1189 = vpop.f32.mrf.mxu0
    %v1190 = vadd.f32 0.0, %v1189
    %v1191 = vpop.f32.mrf.mxu0
    %v1192 = vadd.f32 0.0, %v1191
    %v1193 = vpop.f32.mrf.mxu0
    %v1194 = vpop.f32.mrf.mxu0
    %1195 = vdwg.mxu0
    %1196 = vmatprep.subr.bf16.mxu0 0
    %1197 = vmatpush1.bf16.msra.mxu0 0
    %1198 = vmatprep.subr.bf16.mxu0 0
    %1199 = vmatpush1.bf16.msra.mxu0 0
    %1200 = vmatprep.subr.bf16.mxu0 0
    %1201 = vmatpush1.bf16.msra.mxu0 0
    %1202 = vmatprep.subr.bf16.mxu0 0
    %1203 = vmatpush1.bf16.msra.mxu0 0
    %1204 = vmatprep.subr.bf16.mxu0 0
    %1205 = vmatpush1.bf16.msra.mxu0 0
    %1206 = vmatprep.subr.bf16.mxu0 0
    %1207 = vmatpush1.bf16.msra.mxu0 0
    %1208 = vmatprep.subr.bf16.mxu0 0
    %1209 = vmatpush1.bf16.msra.mxu0 0
    %1210 = vmatprep.subr.bf16.mxu0 %v1153
    %1211 = vmatpush1.bf16.msra.mxu0 %v1150
    %1212 = vmatprep.subr.bf16.mxu0 0
    %1213 = vmatpush2.bf16.msra.mxu0 0
    %1214 = vmatprep.subr.bf16.mxu0 0
    %1215 = vmatpush2.bf16.msra.mxu0 0
    %1216 = vmatprep.subr.bf16.mxu0 0
    %1217 = vmatpush2.bf16.msra.mxu0 0
    %1218 = vmatprep.subr.bf16.mxu0 0
    %1219 = vmatpush2.bf16.msra.mxu0 0
    %1220 = vmatprep.subr.bf16.mxu0 0
    %1221 = vmatpush2.bf16.msra.mxu0 0
    %1222 = vmatprep.subr.bf16.mxu0 0
    %1223 = vmatpush2.bf16.msra.mxu0 0
    %1224 = vmatprep.subr.bf16.mxu0 0
    %1225 = vmatpush2.bf16.msra.mxu0 0
    %1226 = vmatprep.subr.bf16.mxu0 0
    %1227 = vmatpush2.bf16.msra.mxu0 0
    %1228 = vmatprep.mubr.bf16.mxu0 0
    %1229 = vmatmul.mubr.bf16.gmra.mxu0 %v1141
    %v1230 = vpop.f32.mrf.mxu0
    %v1231 = vadd.f32 0.0, %v1230
    %v1232 = vpop.f32.mrf.mxu0
    %v1233 = vadd.f32 0.0, %v1232
    %v1234 = vpop.f32.mrf.mxu0
    %v1235 = vpop.f32.mrf.mxu0
    %1236 = vdwg.mxu0
    %v1237 = vadd.f32 %v1099, %v1190
    %v1238 = vadd.f32 %v1100, %v1192
    %v1239 = vadd.f32 %v1101, %v1231
    %v1240 = vadd.f32 %v1102, %v1233
    %1241 = vrot.lane.b32.xlu0 %v157, 111
    %v1242 = vpop.permute.xlu0 %1241
    %1243 = vrot.lane.b32.xlu0 %v170, 111
    %v1244 = vpop.permute.xlu0 %1243
    %1245 = vrot.lane.b32.xlu0 %v158, 111
    %v1246 = vpop.permute.xlu0 %1245
    %1247 = vrot.lane.b32.xlu0 %v171, 111
    %v1248 = vpop.permute.xlu0 %1247
    %vm1249 = vcmp.lt.s32.totalorder %v183, 111
    %v1250 = vsel %vm1249, %v1246, %v1248
    %v1251 = vsel %vm1249, %v1244, %v1246
    %v1252 = vsel %vm1249, %v1242, %v1244
    %v1253 = vsel %vm1249, %v1248, %v1242
    %v1254 = vlaneseq
    %v1255 = vshrl.u32 %v1254, 7
    %v1256 = vsub.s32 0, %v1255
    %v1257 = vrot.slane %v84, %v1256
    %v1258 = vlaneseq
    %v1259 = vshrl.u32 %v1258, 7
    %v1260 = vsub.s32 0, %v1259
    %v1261 = vrot.slane %v85, %v1260
    %v1262 = vlaneseq
    %v1263 = vshrl.u32 %v1262, 7
    %v1264 = vsub.s32 0, %v1263
    %v1265 = vrot.slane %v86, %v1264
    %v1266 = vlaneseq
    %v1267 = vshrl.u32 %v1266, 7
    %v1268 = vsub.s32 0, %v1267
    %v1269 = vrot.slane %v87, %v1268
    %v1270 = vmul.f32 %v1252, %v1257
    %v1271 = vmul.f32 %v1251, %v1261
    %v1272 = vmul.f32 %v1250, %v1265
    %v1273 = vmul.f32 %v1253, %v1269
    %v1274 = vpack.c.bf16 %v1270, %v1270
    %v1275 = vpack.c.bf16 %v1271, %v1271
    %v1276 = vpack.c.bf16 %v1272, %v1272
    %v1277 = vpack.c.bf16 %v1273, %v1273
    %v1279 = vsel %vm250, %v167, 0
    %v1282 = vsel %vm254, %v1274, 0
    %v1285 = vsel %vm254, %v1275, 0
    %v1288 = vsel %vm254, %v1276, 0
    %v1291 = vsel %vm254, %v1277, 0
    %1293 = vmatprep.subr.bf16.mxu0 0
    %1294 = vmatpush1.bf16.msra.mxu0 0
    %1295 = vmatprep.subr.bf16.mxu0 0
    %1296 = vmatpush1.bf16.msra.mxu0 0
    %1297 = vmatprep.subr.bf16.mxu0 0
    %1298 = vmatpush1.bf16.msra.mxu0 0
    %1299 = vmatprep.subr.bf16.mxu0 0
    %1300 = vmatpush1.bf16.msra.mxu0 0
    %1301 = vmatprep.subr.bf16.mxu0 0
    %1302 = vmatpush1.bf16.msra.mxu0 0
    %1303 = vmatprep.subr.bf16.mxu0 0
    %1304 = vmatpush1.bf16.msra.mxu0 0
    %1305 = vmatprep.subr.bf16.mxu0 0
    %1306 = vmatpush1.bf16.msra.mxu0 0
    %1307 = vmatprep.subr.bf16.mxu0 %v1285
    %1308 = vmatpush1.bf16.msra.mxu0 %v1282
    %1309 = vmatprep.subr.bf16.mxu0 0
    %1310 = vmatpush2.bf16.msra.mxu0 0
    %1311 = vmatprep.subr.bf16.mxu0 0
    %1312 = vmatpush2.bf16.msra.mxu0 0
    %1313 = vmatprep.subr.bf16.mxu0 0
    %1314 = vmatpush2.bf16.msra.mxu0 0
    %1315 = vmatprep.subr.bf16.mxu0 0
    %1316 = vmatpush2.bf16.msra.mxu0 0
    %1317 = vmatprep.subr.bf16.mxu0 0
    %1318 = vmatpush2.bf16.msra.mxu0 0
    %1319 = vmatprep.subr.bf16.mxu0 0
    %1320 = vmatpush2.bf16.msra.mxu0 0
    %1321 = vmatprep.subr.bf16.mxu0 0
    %1322 = vmatpush2.bf16.msra.mxu0 0
    %1323 = vmatprep.subr.bf16.mxu0 0
    %1324 = vmatpush2.bf16.msra.mxu0 0
    %1325 = vmatprep.mubr.bf16.mxu0 0
    %1326 = vmatmul.mubr.bf16.gmra.mxu0 %v1279
    %v1327 = vpop.f32.mrf.mxu0
    %v1328 = vadd.f32 0.0, %v1327
    %v1329 = vpop.f32.mrf.mxu0
    %v1330 = vadd.f32 0.0, %v1329
    %v1331 = vpop.f32.mrf.mxu0
    %v1332 = vpop.f32.mrf.mxu0
    %1333 = vdwg.mxu0
    %1334 = vmatprep.subr.bf16.mxu0 0
    %1335 = vmatpush1.bf16.msra.mxu0 0
    %1336 = vmatprep.subr.bf16.mxu0 0
    %1337 = vmatpush1.bf16.msra.mxu0 0
    %1338 = vmatprep.subr.bf16.mxu0 0
    %1339 = vmatpush1.bf16.msra.mxu0 0
    %1340 = vmatprep.subr.bf16.mxu0 0
    %1341 = vmatpush1.bf16.msra.mxu0 0
    %1342 = vmatprep.subr.bf16.mxu0 0
    %1343 = vmatpush1.bf16.msra.mxu0 0
    %1344 = vmatprep.subr.bf16.mxu0 0
    %1345 = vmatpush1.bf16.msra.mxu0 0
    %1346 = vmatprep.subr.bf16.mxu0 0
    %1347 = vmatpush1.bf16.msra.mxu0 0
    %1348 = vmatprep.subr.bf16.mxu0 %v1291
    %1349 = vmatpush1.bf16.msra.mxu0 %v1288
    %1350 = vmatprep.subr.bf16.mxu0 0
    %1351 = vmatpush2.bf16.msra.mxu0 0
    %1352 = vmatprep.subr.bf16.mxu0 0
    %1353 = vmatpush2.bf16.msra.mxu0 0
    %1354 = vmatprep.subr.bf16.mxu0 0
    %1355 = vmatpush2.bf16.msra.mxu0 0
    %1356 = vmatprep.subr.bf16.mxu0 0
    %1357 = vmatpush2.bf16.msra.mxu0 0
    %1358 = vmatprep.subr.bf16.mxu0 0
    %1359 = vmatpush2.bf16.msra.mxu0 0
    %1360 = vmatprep.subr.bf16.mxu0 0
    %1361 = vmatpush2.bf16.msra.mxu0 0
    %1362 = vmatprep.subr.bf16.mxu0 0
    %1363 = vmatpush2.bf16.msra.mxu0 0
    %1364 = vmatprep.subr.bf16.mxu0 0
    %1365 = vmatpush2.bf16.msra.mxu0 0
    %1366 = vmatprep.mubr.bf16.mxu0 0
    %1367 = vmatmul.mubr.bf16.gmra.mxu0 %v1279
    %v1368 = vpop.f32.mrf.mxu0
    %v1369 = vadd.f32 0.0, %v1368
    %v1370 = vpop.f32.mrf.mxu0
    %v1371 = vadd.f32 0.0, %v1370
    %v1372 = vpop.f32.mrf.mxu0
    %v1373 = vpop.f32.mrf.mxu0
    %1374 = vdwg.mxu0
    %v1375 = vadd.f32 %v1237, %v1328
    %v1376 = vadd.f32 %v1238, %v1330
    %v1377 = vadd.f32 %v1239, %v1369
    %v1378 = vadd.f32 %v1240, %v1371
    %v1379 = vld [vmem:[%s7] sm:$0xff]
    %1381 = vset.pattern.permute.xlu0 0
    %1382 = vperm.xlu0 %1381, %v1379
    %v1383 = vpop.permute.xlu0 %1382
    %v1385 = vadd.f32 %v1375, %v1383
    %v1386 = vadd.f32 %v1376, %v1383
    %v1387 = vadd.f32 %v1377, %v1383
    %v1388 = vadd.f32 %v1378, %v1383
    %v1389 = vld [vmem:[%s4] sm:$0xff]
    %v1390 = vld [vmem:[%s4 + $0x8] sm:$0xff]
    %v1391 = vld [vmem:[%s4 + $0x10] sm:$0xff]
    %v1392 = vld [vmem:[%s4 + $0x18] sm:$0xff]
    %v1393 = vld [vmem:[%s5] sm:$0xff]
    %v1394 = vld [vmem:[%s5 + $0x8] sm:$0xff]
    %v1395 = vld [vmem:[%s5 + $0x10] sm:$0xff]
    %v1396 = vld [vmem:[%s5 + $0x18] sm:$0xff]
    %v1397 = vadd.f32 %v1385, %v1386
    %v1398 = vadd.f32 %v1397, %v1387
    %v1399 = vadd.f32 %v1398, %v1388
    %1400 = vadd.xlane.f32.xlu0 %v1399
    %v1401 = vpop.xlane.xlu0 %1400
    %v1402 = vmul.f32 %v1401, 0.001953125
    %v1403 = vmul.f32 %v1385, %v1385
    %v1404 = vmul.f32 %v1386, %v1386
    %v1405 = vmul.f32 %v1387, %v1387
    %v1406 = vmul.f32 %v1388, %v1388
    %v1407 = vadd.f32 %v1403, %v1404
    %v1408 = vadd.f32 %v1407, %v1405
    %v1409 = vadd.f32 %v1408, %v1406
    %1410 = vadd.xlane.f32.xlu0 %v1409
    %v1411 = vpop.xlane.xlu0 %1410
    %v1412 = vmul.f32 %v1411, 0.001953125
    %v1413 = vmul.f32 %v1402, %v1402
    %v1414 = vsub.f32 %v1412, %v1413
    %v1415 = vadd.f32 %v1414, 1e-05
    %v1416 = vrsqrt.pop %v1415
    %v1417 = vsub.f32 %v1385, %v1402
    %v1418 = vsub.f32 %v1386, %v1402
    %v1419 = vsub.f32 %v1387, %v1402
    %v1420 = vsub.f32 %v1388, %v1402
    %v1421 = vmul.f32 %v1417, %v1416
    %v1422 = vmul.f32 %v1418, %v1416
    %v1423 = vmul.f32 %v1419, %v1416
    %v1424 = vmul.f32 %v1420, %v1416
    %v1425 = vmul.f32 %v1389, %v1421
    %v1426 = vmul.f32 %v1390, %v1422
    %v1427 = vmul.f32 %v1391, %v1423
    %v1428 = vmul.f32 %v1392, %v1424
    %v1429 = vadd.f32 %v1425, %v1393
    %v1430 = vadd.f32 %v1426, %v1394
    %v1431 = vadd.f32 %v1427, %v1395
    %v1432 = vadd.f32 %v1428, %v1396
    %v1433 = vmax.f32 %v1429, 0.0
    %v1434 = vmax.f32 %v1430, 0.0
    %v1435 = vmax.f32 %v1431, 0.0
    %v1436 = vmax.f32 %v1432, 0.0
    %v1437 = vld [vmem:[%s8] sm:$0xf]
    %v1438 = vld [vmem:[%s8 + $0x4] sm:$0xf]
    %v1439 = vld [vmem:[%s8 + $0x8] sm:$0xf]
    %v1440 = vld [vmem:[%s8 + $0xc] sm:$0xf]
    %v1441 = vld [vmem:[%s8 + $0x10] sm:$0xf]
    %v1442 = vld [vmem:[%s8 + $0x14] sm:$0xf]
    %v1443 = vld [vmem:[%s8 + $0x18] sm:$0xf]
    %v1444 = vld [vmem:[%s8 + $0x1c] sm:$0xf]
    %v1445 = vld [vmem:[%s8 + $0x20] sm:$0xf]
    %1446 = vrot.lane.b32.xlu0 %v1433, 17
    %v1447 = vpop.permute.xlu0 %1446
    %1448 = vrot.lane.b32.xlu0 %v1434, 17
    %v1449 = vpop.permute.xlu0 %1448
    %1450 = vrot.lane.b32.xlu0 %v1435, 17
    %v1451 = vpop.permute.xlu0 %1450
    %1452 = vrot.lane.b32.xlu0 %v1436, 17
    %v1453 = vpop.permute.xlu0 %1452
    %v1454 = vsel %vm184, %v1451, %v1453
    %v1455 = vsel %vm184, %v1449, %v1451
    %v1456 = vsel %vm184, %v1447, %v1449
    %v1457 = vsel %vm184, %v1453, %v1447
    %v1458 = vmul.f32 %v1457, %v192
    %v1459 = vmul.f32 %v1456, %v196
    %v1460 = vmul.f32 %v1455, %v200
    %v1461 = vmul.f32 %v1454, %v204
    %v1462 = vpack.c.bf16 %v1458, %v1458
    %v1463 = vpack.c.bf16 %v1459, %v1459
    %v1464 = vpack.c.bf16 %v1460, %v1460
    %v1465 = vpack.c.bf16 %v1461, %v1461
    %1466 = vrot.lane.b32.xlu0 %v1433, 16
    %v1467 = vpop.permute.xlu0 %1466
    %1468 = vrot.lane.b32.xlu0 %v1434, 16
    %v1469 = vpop.permute.xlu0 %1468
    %1470 = vrot.lane.b32.xlu0 %v1435, 16
    %v1471 = vpop.permute.xlu0 %1470
    %1472 = vrot.lane.b32.xlu0 %v1436, 16
    %v1473 = vpop.permute.xlu0 %1472
    %v1474 = vsel %vm221, %v1471, %v1473
    %v1475 = vsel %vm221, %v1469, %v1471
    %v1476 = vsel %vm221, %v1467, %v1469
    %v1477 = vsel %vm221, %v1473, %v1467
    %v1478 = vmul.f32 %v1477, %v229
    %v1479 = vmul.f32 %v1476, %v233
    %v1480 = vmul.f32 %v1475, %v237
    %v1481 = vmul.f32 %v1474, %v241
    %v1482 = vpack.c.bf16 %v1478, %v1478
    %v1483 = vpack.c.bf16 %v1479, %v1479
    %v1484 = vpack.c.bf16 %v1480, %v1480
    %v1485 = vpack.c.bf16 %v1481, %v1481
    %vm1486 = vcmask 64512
    %v1488 = vsel %vm1486, %v1438, 0
    %v1491 = vsel %vm98, %v1482, 0
    %v1494 = vsel %vm98, %v1483, 0
    %v1497 = vsel %vm98, %v1484, 0
    %v1500 = vsel %vm98, %v1485, 0
    %1502 = vmatprep.subr.bf16.mxu0 0
    %1503 = vmatpush1.bf16.msra.mxu0 0
    %1504 = vmatprep.subr.bf16.mxu0 0
    %1505 = vmatpush1.bf16.msra.mxu0 0
    %1506 = vmatprep.subr.bf16.mxu0 0
    %1507 = vmatpush1.bf16.msra.mxu0 0
    %1508 = vmatprep.subr.bf16.mxu0 0
    %1509 = vmatpush1.bf16.msra.mxu0 0
    %1510 = vmatprep.subr.bf16.mxu0 0
    %1511 = vmatpush1.bf16.msra.mxu0 0
    %1512 = vmatprep.subr.bf16.mxu0 0
    %1513 = vmatpush1.bf16.msra.mxu0 0
    %1514 = vmatprep.subr.bf16.mxu0 0
    %1515 = vmatpush1.bf16.msra.mxu0 0
    %1516 = vmatprep.subr.bf16.mxu0 %v1494
    %1517 = vmatpush1.bf16.msra.mxu0 %v1491
    %1518 = vmatprep.subr.bf16.mxu0 0
    %1519 = vmatpush2.bf16.msra.mxu0 0
    %1520 = vmatprep.subr.bf16.mxu0 0
    %1521 = vmatpush2.bf16.msra.mxu0 0
    %1522 = vmatprep.subr.bf16.mxu0 0
    %1523 = vmatpush2.bf16.msra.mxu0 0
    %1524 = vmatprep.subr.bf16.mxu0 0
    %1525 = vmatpush2.bf16.msra.mxu0 0
    %1526 = vmatprep.subr.bf16.mxu0 0
    %1527 = vmatpush2.bf16.msra.mxu0 0
    %1528 = vmatprep.subr.bf16.mxu0 0
    %1529 = vmatpush2.bf16.msra.mxu0 0
    %1530 = vmatprep.subr.bf16.mxu0 0
    %1531 = vmatpush2.bf16.msra.mxu0 0
    %1532 = vmatprep.subr.bf16.mxu0 0
    %1533 = vmatpush2.bf16.msra.mxu0 0
    %1534 = vmatprep.mubr.bf16.mxu0 0
    %1535 = vmatmul.mubr.bf16.gmra.mxu0 %v1488
    %v1536 = vpop.f32.mrf.mxu0
    %v1537 = vadd.f32 0.0, %v1536
    %v1538 = vpop.f32.mrf.mxu0
    %v1539 = vadd.f32 0.0, %v1538
    %v1540 = vpop.f32.mrf.mxu0
    %v1541 = vpop.f32.mrf.mxu0
    %1542 = vdwg.mxu0
    %1543 = vmatprep.subr.bf16.mxu0 0
    %1544 = vmatpush1.bf16.msra.mxu0 0
    %1545 = vmatprep.subr.bf16.mxu0 0
    %1546 = vmatpush1.bf16.msra.mxu0 0
    %1547 = vmatprep.subr.bf16.mxu0 0
    %1548 = vmatpush1.bf16.msra.mxu0 0
    %1549 = vmatprep.subr.bf16.mxu0 0
    %1550 = vmatpush1.bf16.msra.mxu0 0
    %1551 = vmatprep.subr.bf16.mxu0 0
    %1552 = vmatpush1.bf16.msra.mxu0 0
    %1553 = vmatprep.subr.bf16.mxu0 0
    %1554 = vmatpush1.bf16.msra.mxu0 0
    %1555 = vmatprep.subr.bf16.mxu0 0
    %1556 = vmatpush1.bf16.msra.mxu0 0
    %1557 = vmatprep.subr.bf16.mxu0 %v1500
    %1558 = vmatpush1.bf16.msra.mxu0 %v1497
    %1559 = vmatprep.subr.bf16.mxu0 0
    %1560 = vmatpush2.bf16.msra.mxu0 0
    %1561 = vmatprep.subr.bf16.mxu0 0
    %1562 = vmatpush2.bf16.msra.mxu0 0
    %1563 = vmatprep.subr.bf16.mxu0 0
    %1564 = vmatpush2.bf16.msra.mxu0 0
    %1565 = vmatprep.subr.bf16.mxu0 0
    %1566 = vmatpush2.bf16.msra.mxu0 0
    %1567 = vmatprep.subr.bf16.mxu0 0
    %1568 = vmatpush2.bf16.msra.mxu0 0
    %1569 = vmatprep.subr.bf16.mxu0 0
    %1570 = vmatpush2.bf16.msra.mxu0 0
    %1571 = vmatprep.subr.bf16.mxu0 0
    %1572 = vmatpush2.bf16.msra.mxu0 0
    %1573 = vmatprep.subr.bf16.mxu0 0
    %1574 = vmatpush2.bf16.msra.mxu0 0
    %1575 = vmatprep.mubr.bf16.mxu0 0
    %1576 = vmatmul.mubr.bf16.gmra.mxu0 %v1488
    %v1577 = vpop.f32.mrf.mxu0
    %v1578 = vadd.f32 0.0, %v1577
    %v1579 = vpop.f32.mrf.mxu0
    %v1580 = vadd.f32 0.0, %v1579
    %v1581 = vpop.f32.mrf.mxu0
    %v1582 = vpop.f32.mrf.mxu0
    %1583 = vdwg.mxu0
    %v1585 = vsel %vm1486, %v1437, 0
    %v1588 = vsel %vm98, %v1462, 0
    %v1591 = vsel %vm98, %v1463, 0
    %v1594 = vsel %vm98, %v1464, 0
    %v1597 = vsel %vm98, %v1465, 0
    %1599 = vmatprep.subr.bf16.mxu0 0
    %1600 = vmatpush1.bf16.msra.mxu0 0
    %1601 = vmatprep.subr.bf16.mxu0 0
    %1602 = vmatpush1.bf16.msra.mxu0 0
    %1603 = vmatprep.subr.bf16.mxu0 0
    %1604 = vmatpush1.bf16.msra.mxu0 0
    %1605 = vmatprep.subr.bf16.mxu0 0
    %1606 = vmatpush1.bf16.msra.mxu0 0
    %1607 = vmatprep.subr.bf16.mxu0 0
    %1608 = vmatpush1.bf16.msra.mxu0 0
    %1609 = vmatprep.subr.bf16.mxu0 0
    %1610 = vmatpush1.bf16.msra.mxu0 0
    %1611 = vmatprep.subr.bf16.mxu0 0
    %1612 = vmatpush1.bf16.msra.mxu0 0
    %1613 = vmatprep.subr.bf16.mxu0 %v1591
    %1614 = vmatpush1.bf16.msra.mxu0 %v1588
    %1615 = vmatprep.subr.bf16.mxu0 0
    %1616 = vmatpush2.bf16.msra.mxu0 0
    %1617 = vmatprep.subr.bf16.mxu0 0
    %1618 = vmatpush2.bf16.msra.mxu0 0
    %1619 = vmatprep.subr.bf16.mxu0 0
    %1620 = vmatpush2.bf16.msra.mxu0 0
    %1621 = vmatprep.subr.bf16.mxu0 0
    %1622 = vmatpush2.bf16.msra.mxu0 0
    %1623 = vmatprep.subr.bf16.mxu0 0
    %1624 = vmatpush2.bf16.msra.mxu0 0
    %1625 = vmatprep.subr.bf16.mxu0 0
    %1626 = vmatpush2.bf16.msra.mxu0 0
    %1627 = vmatprep.subr.bf16.mxu0 0
    %1628 = vmatpush2.bf16.msra.mxu0 0
    %1629 = vmatprep.subr.bf16.mxu0 0
    %1630 = vmatpush2.bf16.msra.mxu0 0
    %1631 = vmatprep.mubr.bf16.mxu0 0
    %1632 = vmatmul.mubr.bf16.gmra.mxu0 %v1585
    %v1633 = vpop.f32.mrf.mxu0
    %v1634 = vadd.f32 %v1537, %v1633
    %v1635 = vpop.f32.mrf.mxu0
    %v1636 = vadd.f32 %v1539, %v1635
    %v1637 = vpop.f32.mrf.mxu0
    %v1638 = vpop.f32.mrf.mxu0
    %1639 = vdwg.mxu0
    %1640 = vmatprep.subr.bf16.mxu0 0
    %1641 = vmatpush1.bf16.msra.mxu0 0
    %1642 = vmatprep.subr.bf16.mxu0 0
    %1643 = vmatpush1.bf16.msra.mxu0 0
    %1644 = vmatprep.subr.bf16.mxu0 0
    %1645 = vmatpush1.bf16.msra.mxu0 0
    %1646 = vmatprep.subr.bf16.mxu0 0
    %1647 = vmatpush1.bf16.msra.mxu0 0
    %1648 = vmatprep.subr.bf16.mxu0 0
    %1649 = vmatpush1.bf16.msra.mxu0 0
    %1650 = vmatprep.subr.bf16.mxu0 0
    %1651 = vmatpush1.bf16.msra.mxu0 0
    %1652 = vmatprep.subr.bf16.mxu0 0
    %1653 = vmatpush1.bf16.msra.mxu0 0
    %1654 = vmatprep.subr.bf16.mxu0 %v1597
    %1655 = vmatpush1.bf16.msra.mxu0 %v1594
    %1656 = vmatprep.subr.bf16.mxu0 0
    %1657 = vmatpush2.bf16.msra.mxu0 0
    %1658 = vmatprep.subr.bf16.mxu0 0
    %1659 = vmatpush2.bf16.msra.mxu0 0
    %1660 = vmatprep.subr.bf16.mxu0 0
    %1661 = vmatpush2.bf16.msra.mxu0 0
    %1662 = vmatprep.subr.bf16.mxu0 0
    %1663 = vmatpush2.bf16.msra.mxu0 0
    %1664 = vmatprep.subr.bf16.mxu0 0
    %1665 = vmatpush2.bf16.msra.mxu0 0
    %1666 = vmatprep.subr.bf16.mxu0 0
    %1667 = vmatpush2.bf16.msra.mxu0 0
    %1668 = vmatprep.subr.bf16.mxu0 0
    %1669 = vmatpush2.bf16.msra.mxu0 0
    %1670 = vmatprep.subr.bf16.mxu0 0
    %1671 = vmatpush2.bf16.msra.mxu0 0
    %1672 = vmatprep.mubr.bf16.mxu0 0
    %1673 = vmatmul.mubr.bf16.gmra.mxu0 %v1585
    %v1674 = vpop.f32.mrf.mxu0
    %v1675 = vadd.f32 %v1578, %v1674
    %v1676 = vpop.f32.mrf.mxu0
    %v1677 = vadd.f32 %v1580, %v1676
    %v1678 = vpop.f32.mrf.mxu0
    %v1679 = vpop.f32.mrf.mxu0
    %1680 = vdwg.mxu0
    %1681 = vrot.lane.b32.xlu0 %v1433, 15
    %v1682 = vpop.permute.xlu0 %1681
    %1683 = vrot.lane.b32.xlu0 %v1434, 15
    %v1684 = vpop.permute.xlu0 %1683
    %1685 = vrot.lane.b32.xlu0 %v1435, 15
    %v1686 = vpop.permute.xlu0 %1685
    %1687 = vrot.lane.b32.xlu0 %v1436, 15
    %v1688 = vpop.permute.xlu0 %1687
    %v1689 = vsel %vm454, %v1686, %v1688
    %v1690 = vsel %vm454, %v1684, %v1686
    %v1691 = vsel %vm454, %v1682, %v1684
    %v1692 = vsel %vm454, %v1688, %v1682
    %v1693 = vmul.f32 %v1692, %v462
    %v1694 = vmul.f32 %v1691, %v466
    %v1695 = vmul.f32 %v1690, %v470
    %v1696 = vmul.f32 %v1689, %v474
    %v1697 = vpack.c.bf16 %v1693, %v1693
    %v1698 = vpack.c.bf16 %v1694, %v1694
    %v1699 = vpack.c.bf16 %v1695, %v1695
    %v1700 = vpack.c.bf16 %v1696, %v1696
    %v1702 = vsel %vm1486, %v1439, 0
    %v1705 = vsel %vm98, %v1697, 0
    %v1708 = vsel %vm98, %v1698, 0
    %v1711 = vsel %vm98, %v1699, 0
    %v1714 = vsel %vm98, %v1700, 0
    %1716 = vmatprep.subr.bf16.mxu0 0
    %1717 = vmatpush1.bf16.msra.mxu0 0
    %1718 = vmatprep.subr.bf16.mxu0 0
    %1719 = vmatpush1.bf16.msra.mxu0 0
    %1720 = vmatprep.subr.bf16.mxu0 0
    %1721 = vmatpush1.bf16.msra.mxu0 0
    %1722 = vmatprep.subr.bf16.mxu0 0
    %1723 = vmatpush1.bf16.msra.mxu0 0
    %1724 = vmatprep.subr.bf16.mxu0 0
    %1725 = vmatpush1.bf16.msra.mxu0 0
    %1726 = vmatprep.subr.bf16.mxu0 0
    %1727 = vmatpush1.bf16.msra.mxu0 0
    %1728 = vmatprep.subr.bf16.mxu0 0
    %1729 = vmatpush1.bf16.msra.mxu0 0
    %1730 = vmatprep.subr.bf16.mxu0 %v1708
    %1731 = vmatpush1.bf16.msra.mxu0 %v1705
    %1732 = vmatprep.subr.bf16.mxu0 0
    %1733 = vmatpush2.bf16.msra.mxu0 0
    %1734 = vmatprep.subr.bf16.mxu0 0
    %1735 = vmatpush2.bf16.msra.mxu0 0
    %1736 = vmatprep.subr.bf16.mxu0 0
    %1737 = vmatpush2.bf16.msra.mxu0 0
    %1738 = vmatprep.subr.bf16.mxu0 0
    %1739 = vmatpush2.bf16.msra.mxu0 0
    %1740 = vmatprep.subr.bf16.mxu0 0
    %1741 = vmatpush2.bf16.msra.mxu0 0
    %1742 = vmatprep.subr.bf16.mxu0 0
    %1743 = vmatpush2.bf16.msra.mxu0 0
    %1744 = vmatprep.subr.bf16.mxu0 0
    %1745 = vmatpush2.bf16.msra.mxu0 0
    %1746 = vmatprep.subr.bf16.mxu0 0
    %1747 = vmatpush2.bf16.msra.mxu0 0
    %1748 = vmatprep.mubr.bf16.mxu0 0
    %1749 = vmatmul.mubr.bf16.gmra.mxu0 %v1702
    %v1750 = vpop.f32.mrf.mxu0
    %v1751 = vadd.f32 0.0, %v1750
    %v1752 = vpop.f32.mrf.mxu0
    %v1753 = vadd.f32 0.0, %v1752
    %v1754 = vpop.f32.mrf.mxu0
    %v1755 = vpop.f32.mrf.mxu0
    %1756 = vdwg.mxu0
    %1757 = vmatprep.subr.bf16.mxu0 0
    %1758 = vmatpush1.bf16.msra.mxu0 0
    %1759 = vmatprep.subr.bf16.mxu0 0
    %1760 = vmatpush1.bf16.msra.mxu0 0
    %1761 = vmatprep.subr.bf16.mxu0 0
    %1762 = vmatpush1.bf16.msra.mxu0 0
    %1763 = vmatprep.subr.bf16.mxu0 0
    %1764 = vmatpush1.bf16.msra.mxu0 0
    %1765 = vmatprep.subr.bf16.mxu0 0
    %1766 = vmatpush1.bf16.msra.mxu0 0
    %1767 = vmatprep.subr.bf16.mxu0 0
    %1768 = vmatpush1.bf16.msra.mxu0 0
    %1769 = vmatprep.subr.bf16.mxu0 0
    %1770 = vmatpush1.bf16.msra.mxu0 0
    %1771 = vmatprep.subr.bf16.mxu0 %v1714
    %1772 = vmatpush1.bf16.msra.mxu0 %v1711
    %1773 = vmatprep.subr.bf16.mxu0 0
    %1774 = vmatpush2.bf16.msra.mxu0 0
    %1775 = vmatprep.subr.bf16.mxu0 0
    %1776 = vmatpush2.bf16.msra.mxu0 0
    %1777 = vmatprep.subr.bf16.mxu0 0
    %1778 = vmatpush2.bf16.msra.mxu0 0
    %1779 = vmatprep.subr.bf16.mxu0 0
    %1780 = vmatpush2.bf16.msra.mxu0 0
    %1781 = vmatprep.subr.bf16.mxu0 0
    %1782 = vmatpush2.bf16.msra.mxu0 0
    %1783 = vmatprep.subr.bf16.mxu0 0
    %1784 = vmatpush2.bf16.msra.mxu0 0
    %1785 = vmatprep.subr.bf16.mxu0 0
    %1786 = vmatpush2.bf16.msra.mxu0 0
    %1787 = vmatprep.subr.bf16.mxu0 0
    %1788 = vmatpush2.bf16.msra.mxu0 0
    %1789 = vmatprep.mubr.bf16.mxu0 0
    %1790 = vmatmul.mubr.bf16.gmra.mxu0 %v1702
    %v1791 = vpop.f32.mrf.mxu0
    %v1792 = vadd.f32 0.0, %v1791
    %v1793 = vpop.f32.mrf.mxu0
    %v1794 = vadd.f32 0.0, %v1793
    %v1795 = vpop.f32.mrf.mxu0
    %v1796 = vpop.f32.mrf.mxu0
    %1797 = vdwg.mxu0
    %v1798 = vadd.f32 %v1634, %v1751
    %v1799 = vadd.f32 %v1636, %v1753
    %v1800 = vadd.f32 %v1675, %v1792
    %v1801 = vadd.f32 %v1677, %v1794
    %1802 = vrot.lane.b32.xlu0 %v1433, 1
    %v1803 = vpop.permute.xlu0 %1802
    %1804 = vrot.lane.b32.xlu0 %v1434, 1
    %v1805 = vpop.permute.xlu0 %1804
    %1806 = vrot.lane.b32.xlu0 %v1435, 1
    %v1807 = vpop.permute.xlu0 %1806
    %1808 = vrot.lane.b32.xlu0 %v1436, 1
    %v1809 = vpop.permute.xlu0 %1808
    %v1810 = vsel %vm592, %v1807, %v1809
    %v1811 = vsel %vm592, %v1805, %v1807
    %v1812 = vsel %vm592, %v1803, %v1805
    %v1813 = vsel %vm592, %v1809, %v1803
    %v1814 = vmul.f32 %v1813, %v600
    %v1815 = vmul.f32 %v1812, %v604
    %v1816 = vmul.f32 %v1811, %v608
    %v1817 = vmul.f32 %v1810, %v612
    %v1818 = vpack.c.bf16 %v1814, %v1814
    %v1819 = vpack.c.bf16 %v1815, %v1815
    %v1820 = vpack.c.bf16 %v1816, %v1816
    %v1821 = vpack.c.bf16 %v1817, %v1817
    %v1823 = vsel %vm1486, %v1440, 0
    %v1826 = vsel %vm98, %v1818, 0
    %v1829 = vsel %vm98, %v1819, 0
    %v1832 = vsel %vm98, %v1820, 0
    %v1835 = vsel %vm98, %v1821, 0
    %1837 = vmatprep.subr.bf16.mxu0 0
    %1838 = vmatpush1.bf16.msra.mxu0 0
    %1839 = vmatprep.subr.bf16.mxu0 0
    %1840 = vmatpush1.bf16.msra.mxu0 0
    %1841 = vmatprep.subr.bf16.mxu0 0
    %1842 = vmatpush1.bf16.msra.mxu0 0
    %1843 = vmatprep.subr.bf16.mxu0 0
    %1844 = vmatpush1.bf16.msra.mxu0 0
    %1845 = vmatprep.subr.bf16.mxu0 0
    %1846 = vmatpush1.bf16.msra.mxu0 0
    %1847 = vmatprep.subr.bf16.mxu0 0
    %1848 = vmatpush1.bf16.msra.mxu0 0
    %1849 = vmatprep.subr.bf16.mxu0 0
    %1850 = vmatpush1.bf16.msra.mxu0 0
    %1851 = vmatprep.subr.bf16.mxu0 %v1829
    %1852 = vmatpush1.bf16.msra.mxu0 %v1826
    %1853 = vmatprep.subr.bf16.mxu0 0
    %1854 = vmatpush2.bf16.msra.mxu0 0
    %1855 = vmatprep.subr.bf16.mxu0 0
    %1856 = vmatpush2.bf16.msra.mxu0 0
    %1857 = vmatprep.subr.bf16.mxu0 0
    %1858 = vmatpush2.bf16.msra.mxu0 0
    %1859 = vmatprep.subr.bf16.mxu0 0
    %1860 = vmatpush2.bf16.msra.mxu0 0
    %1861 = vmatprep.subr.bf16.mxu0 0
    %1862 = vmatpush2.bf16.msra.mxu0 0
    %1863 = vmatprep.subr.bf16.mxu0 0
    %1864 = vmatpush2.bf16.msra.mxu0 0
    %1865 = vmatprep.subr.bf16.mxu0 0
    %1866 = vmatpush2.bf16.msra.mxu0 0
    %1867 = vmatprep.subr.bf16.mxu0 0
    %1868 = vmatpush2.bf16.msra.mxu0 0
    %1869 = vmatprep.mubr.bf16.mxu0 0
    %1870 = vmatmul.mubr.bf16.gmra.mxu0 %v1823
    %v1871 = vpop.f32.mrf.mxu0
    %v1872 = vadd.f32 0.0, %v1871
    %v1873 = vpop.f32.mrf.mxu0
    %v1874 = vadd.f32 0.0, %v1873
    %v1875 = vpop.f32.mrf.mxu0
    %v1876 = vpop.f32.mrf.mxu0
    %1877 = vdwg.mxu0
    %1878 = vmatprep.subr.bf16.mxu0 0
    %1879 = vmatpush1.bf16.msra.mxu0 0
    %1880 = vmatprep.subr.bf16.mxu0 0
    %1881 = vmatpush1.bf16.msra.mxu0 0
    %1882 = vmatprep.subr.bf16.mxu0 0
    %1883 = vmatpush1.bf16.msra.mxu0 0
    %1884 = vmatprep.subr.bf16.mxu0 0
    %1885 = vmatpush1.bf16.msra.mxu0 0
    %1886 = vmatprep.subr.bf16.mxu0 0
    %1887 = vmatpush1.bf16.msra.mxu0 0
    %1888 = vmatprep.subr.bf16.mxu0 0
    %1889 = vmatpush1.bf16.msra.mxu0 0
    %1890 = vmatprep.subr.bf16.mxu0 0
    %1891 = vmatpush1.bf16.msra.mxu0 0
    %1892 = vmatprep.subr.bf16.mxu0 %v1835
    %1893 = vmatpush1.bf16.msra.mxu0 %v1832
    %1894 = vmatprep.subr.bf16.mxu0 0
    %1895 = vmatpush2.bf16.msra.mxu0 0
    %1896 = vmatprep.subr.bf16.mxu0 0
    %1897 = vmatpush2.bf16.msra.mxu0 0
    %1898 = vmatprep.subr.bf16.mxu0 0
    %1899 = vmatpush2.bf16.msra.mxu0 0
    %1900 = vmatprep.subr.bf16.mxu0 0
    %1901 = vmatpush2.bf16.msra.mxu0 0
    %1902 = vmatprep.subr.bf16.mxu0 0
    %1903 = vmatpush2.bf16.msra.mxu0 0
    %1904 = vmatprep.subr.bf16.mxu0 0
    %1905 = vmatpush2.bf16.msra.mxu0 0
    %1906 = vmatprep.subr.bf16.mxu0 0
    %1907 = vmatpush2.bf16.msra.mxu0 0
    %1908 = vmatprep.subr.bf16.mxu0 0
    %1909 = vmatpush2.bf16.msra.mxu0 0
    %1910 = vmatprep.mubr.bf16.mxu0 0
    %1911 = vmatmul.mubr.bf16.gmra.mxu0 %v1823
    %v1912 = vpop.f32.mrf.mxu0
    %v1913 = vadd.f32 0.0, %v1912
    %v1914 = vpop.f32.mrf.mxu0
    %v1915 = vadd.f32 0.0, %v1914
    %v1916 = vpop.f32.mrf.mxu0
    %v1917 = vpop.f32.mrf.mxu0
    %1918 = vdwg.mxu0
    %v1919 = vadd.f32 %v1798, %v1872
    %v1920 = vadd.f32 %v1799, %v1874
    %v1921 = vadd.f32 %v1800, %v1913
    %v1922 = vadd.f32 %v1801, %v1915
    %v1923 = vpack.c.bf16 %v1433, %v1433
    %v1924 = vpack.c.bf16 %v1434, %v1434
    %v1925 = vpack.c.bf16 %v1435, %v1435
    %v1926 = vpack.c.bf16 %v1436, %v1436
    %v1928 = vsel %vm1486, %v1441, 0
    %v1931 = vsel %vm98, %v1923, 0
    %v1934 = vsel %vm98, %v1924, 0
    %v1937 = vsel %vm98, %v1925, 0
    %v1940 = vsel %vm98, %v1926, 0
    %1942 = vmatprep.subr.bf16.mxu0 0
    %1943 = vmatpush1.bf16.msra.mxu0 0
    %1944 = vmatprep.subr.bf16.mxu0 0
    %1945 = vmatpush1.bf16.msra.mxu0 0
    %1946 = vmatprep.subr.bf16.mxu0 0
    %1947 = vmatpush1.bf16.msra.mxu0 0
    %1948 = vmatprep.subr.bf16.mxu0 0
    %1949 = vmatpush1.bf16.msra.mxu0 0
    %1950 = vmatprep.subr.bf16.mxu0 0
    %1951 = vmatpush1.bf16.msra.mxu0 0
    %1952 = vmatprep.subr.bf16.mxu0 0
    %1953 = vmatpush1.bf16.msra.mxu0 0
    %1954 = vmatprep.subr.bf16.mxu0 0
    %1955 = vmatpush1.bf16.msra.mxu0 0
    %1956 = vmatprep.subr.bf16.mxu0 %v1934
    %1957 = vmatpush1.bf16.msra.mxu0 %v1931
    %1958 = vmatprep.subr.bf16.mxu0 0
    %1959 = vmatpush2.bf16.msra.mxu0 0
    %1960 = vmatprep.subr.bf16.mxu0 0
    %1961 = vmatpush2.bf16.msra.mxu0 0
    %1962 = vmatprep.subr.bf16.mxu0 0
    %1963 = vmatpush2.bf16.msra.mxu0 0
    %1964 = vmatprep.subr.bf16.mxu0 0
    %1965 = vmatpush2.bf16.msra.mxu0 0
    %1966 = vmatprep.subr.bf16.mxu0 0
    %1967 = vmatpush2.bf16.msra.mxu0 0
    %1968 = vmatprep.subr.bf16.mxu0 0
    %1969 = vmatpush2.bf16.msra.mxu0 0
    %1970 = vmatprep.subr.bf16.mxu0 0
    %1971 = vmatpush2.bf16.msra.mxu0 0
    %1972 = vmatprep.subr.bf16.mxu0 0
    %1973 = vmatpush2.bf16.msra.mxu0 0
    %1974 = vmatprep.mubr.bf16.mxu0 0
    %1975 = vmatmul.mubr.bf16.gmra.mxu0 %v1928
    %v1976 = vpop.f32.mrf.mxu0
    %v1977 = vadd.f32 0.0, %v1976
    %v1978 = vpop.f32.mrf.mxu0
    %v1979 = vadd.f32 0.0, %v1978
    %v1980 = vpop.f32.mrf.mxu0
    %v1981 = vpop.f32.mrf.mxu0
    %1982 = vdwg.mxu0
    %1983 = vmatprep.subr.bf16.mxu0 0
    %1984 = vmatpush1.bf16.msra.mxu0 0
    %1985 = vmatprep.subr.bf16.mxu0 0
    %1986 = vmatpush1.bf16.msra.mxu0 0
    %1987 = vmatprep.subr.bf16.mxu0 0
    %1988 = vmatpush1.bf16.msra.mxu0 0
    %1989 = vmatprep.subr.bf16.mxu0 0
    %1990 = vmatpush1.bf16.msra.mxu0 0
    %1991 = vmatprep.subr.bf16.mxu0 0
    %1992 = vmatpush1.bf16.msra.mxu0 0
    %1993 = vmatprep.subr.bf16.mxu0 0
    %1994 = vmatpush1.bf16.msra.mxu0 0
    %1995 = vmatprep.subr.bf16.mxu0 0
    %1996 = vmatpush1.bf16.msra.mxu0 0
    %1997 = vmatprep.subr.bf16.mxu0 %v1940
    %1998 = vmatpush1.bf16.msra.mxu0 %v1937
    %1999 = vmatprep.subr.bf16.mxu0 0
    %2000 = vmatpush2.bf16.msra.mxu0 0
    %2001 = vmatprep.subr.bf16.mxu0 0
    %2002 = vmatpush2.bf16.msra.mxu0 0
    %2003 = vmatprep.subr.bf16.mxu0 0
    %2004 = vmatpush2.bf16.msra.mxu0 0
    %2005 = vmatprep.subr.bf16.mxu0 0
    %2006 = vmatpush2.bf16.msra.mxu0 0
    %2007 = vmatprep.subr.bf16.mxu0 0
    %2008 = vmatpush2.bf16.msra.mxu0 0
    %2009 = vmatprep.subr.bf16.mxu0 0
    %2010 = vmatpush2.bf16.msra.mxu0 0
    %2011 = vmatprep.subr.bf16.mxu0 0
    %2012 = vmatpush2.bf16.msra.mxu0 0
    %2013 = vmatprep.subr.bf16.mxu0 0
    %2014 = vmatpush2.bf16.msra.mxu0 0
    %2015 = vmatprep.mubr.bf16.mxu0 0
    %2016 = vmatmul.mubr.bf16.gmra.mxu0 %v1928
    %v2017 = vpop.f32.mrf.mxu0
    %v2018 = vadd.f32 0.0, %v2017
    %v2019 = vpop.f32.mrf.mxu0
    %v2020 = vadd.f32 0.0, %v2019
    %v2021 = vpop.f32.mrf.mxu0
    %v2022 = vpop.f32.mrf.mxu0
    %2023 = vdwg.mxu0
    %v2024 = vadd.f32 %v1919, %v1977
    %v2025 = vadd.f32 %v1920, %v1979
    %v2026 = vadd.f32 %v1921, %v2018
    %v2027 = vadd.f32 %v1922, %v2020
    %2028 = vrot.lane.b32.xlu0 %v1433, 127
    %v2029 = vpop.permute.xlu0 %2028
    %2030 = vrot.lane.b32.xlu0 %v1434, 127
    %v2031 = vpop.permute.xlu0 %2030
    %2032 = vrot.lane.b32.xlu0 %v1435, 127
    %v2033 = vpop.permute.xlu0 %2032
    %2034 = vrot.lane.b32.xlu0 %v1436, 127
    %v2035 = vpop.permute.xlu0 %2034
    %v2036 = vsel %vm835, %v2033, %v2035
    %v2037 = vsel %vm835, %v2031, %v2033
    %v2038 = vsel %vm835, %v2029, %v2031
    %v2039 = vsel %vm835, %v2035, %v2029
    %v2040 = vmul.f32 %v2038, %v843
    %v2041 = vmul.f32 %v2037, %v847
    %v2042 = vmul.f32 %v2036, %v851
    %v2043 = vmul.f32 %v2039, %v855
    %v2044 = vpack.c.bf16 %v2040, %v2040
    %v2045 = vpack.c.bf16 %v2041, %v2041
    %v2046 = vpack.c.bf16 %v2042, %v2042
    %v2047 = vpack.c.bf16 %v2043, %v2043
    %v2049 = vsel %vm1486, %v1442, 0
    %v2052 = vsel %vm98, %v2044, 0
    %v2055 = vsel %vm98, %v2045, 0
    %v2058 = vsel %vm98, %v2046, 0
    %v2061 = vsel %vm98, %v2047, 0
    %2063 = vmatprep.subr.bf16.mxu0 0
    %2064 = vmatpush1.bf16.msra.mxu0 0
    %2065 = vmatprep.subr.bf16.mxu0 0
    %2066 = vmatpush1.bf16.msra.mxu0 0
    %2067 = vmatprep.subr.bf16.mxu0 0
    %2068 = vmatpush1.bf16.msra.mxu0 0
    %2069 = vmatprep.subr.bf16.mxu0 0
    %2070 = vmatpush1.bf16.msra.mxu0 0
    %2071 = vmatprep.subr.bf16.mxu0 0
    %2072 = vmatpush1.bf16.msra.mxu0 0
    %2073 = vmatprep.subr.bf16.mxu0 0
    %2074 = vmatpush1.bf16.msra.mxu0 0
    %2075 = vmatprep.subr.bf16.mxu0 0
    %2076 = vmatpush1.bf16.msra.mxu0 0
    %2077 = vmatprep.subr.bf16.mxu0 %v2055
    %2078 = vmatpush1.bf16.msra.mxu0 %v2052
    %2079 = vmatprep.subr.bf16.mxu0 0
    %2080 = vmatpush2.bf16.msra.mxu0 0
    %2081 = vmatprep.subr.bf16.mxu0 0
    %2082 = vmatpush2.bf16.msra.mxu0 0
    %2083 = vmatprep.subr.bf16.mxu0 0
    %2084 = vmatpush2.bf16.msra.mxu0 0
    %2085 = vmatprep.subr.bf16.mxu0 0
    %2086 = vmatpush2.bf16.msra.mxu0 0
    %2087 = vmatprep.subr.bf16.mxu0 0
    %2088 = vmatpush2.bf16.msra.mxu0 0
    %2089 = vmatprep.subr.bf16.mxu0 0
    %2090 = vmatpush2.bf16.msra.mxu0 0
    %2091 = vmatprep.subr.bf16.mxu0 0
    %2092 = vmatpush2.bf16.msra.mxu0 0
    %2093 = vmatprep.subr.bf16.mxu0 0
    %2094 = vmatpush2.bf16.msra.mxu0 0
    %2095 = vmatprep.mubr.bf16.mxu0 0
    %2096 = vmatmul.mubr.bf16.gmra.mxu0 %v2049
    %v2097 = vpop.f32.mrf.mxu0
    %v2098 = vadd.f32 0.0, %v2097
    %v2099 = vpop.f32.mrf.mxu0
    %v2100 = vadd.f32 0.0, %v2099
    %v2101 = vpop.f32.mrf.mxu0
    %v2102 = vpop.f32.mrf.mxu0
    %2103 = vdwg.mxu0
    %2104 = vmatprep.subr.bf16.mxu0 0
    %2105 = vmatpush1.bf16.msra.mxu0 0
    %2106 = vmatprep.subr.bf16.mxu0 0
    %2107 = vmatpush1.bf16.msra.mxu0 0
    %2108 = vmatprep.subr.bf16.mxu0 0
    %2109 = vmatpush1.bf16.msra.mxu0 0
    %2110 = vmatprep.subr.bf16.mxu0 0
    %2111 = vmatpush1.bf16.msra.mxu0 0
    %2112 = vmatprep.subr.bf16.mxu0 0
    %2113 = vmatpush1.bf16.msra.mxu0 0
    %2114 = vmatprep.subr.bf16.mxu0 0
    %2115 = vmatpush1.bf16.msra.mxu0 0
    %2116 = vmatprep.subr.bf16.mxu0 0
    %2117 = vmatpush1.bf16.msra.mxu0 0
    %2118 = vmatprep.subr.bf16.mxu0 %v2061
    %2119 = vmatpush1.bf16.msra.mxu0 %v2058
    %2120 = vmatprep.subr.bf16.mxu0 0
    %2121 = vmatpush2.bf16.msra.mxu0 0
    %2122 = vmatprep.subr.bf16.mxu0 0
    %2123 = vmatpush2.bf16.msra.mxu0 0
    %2124 = vmatprep.subr.bf16.mxu0 0
    %2125 = vmatpush2.bf16.msra.mxu0 0
    %2126 = vmatprep.subr.bf16.mxu0 0
    %2127 = vmatpush2.bf16.msra.mxu0 0
    %2128 = vmatprep.subr.bf16.mxu0 0
    %2129 = vmatpush2.bf16.msra.mxu0 0
    %2130 = vmatprep.subr.bf16.mxu0 0
    %2131 = vmatpush2.bf16.msra.mxu0 0
    %2132 = vmatprep.subr.bf16.mxu0 0
    %2133 = vmatpush2.bf16.msra.mxu0 0
    %2134 = vmatprep.subr.bf16.mxu0 0
    %2135 = vmatpush2.bf16.msra.mxu0 0
    %2136 = vmatprep.mubr.bf16.mxu0 0
    %2137 = vmatmul.mubr.bf16.gmra.mxu0 %v2049
    %v2138 = vpop.f32.mrf.mxu0
    %v2139 = vadd.f32 0.0, %v2138
    %v2140 = vpop.f32.mrf.mxu0
    %v2141 = vadd.f32 0.0, %v2140
    %v2142 = vpop.f32.mrf.mxu0
    %v2143 = vpop.f32.mrf.mxu0
    %2144 = vdwg.mxu0
    %v2145 = vadd.f32 %v2024, %v2098
    %v2146 = vadd.f32 %v2025, %v2100
    %v2147 = vadd.f32 %v2026, %v2139
    %v2148 = vadd.f32 %v2027, %v2141
    %2149 = vrot.lane.b32.xlu0 %v1433, 113
    %v2150 = vpop.permute.xlu0 %2149
    %2151 = vrot.lane.b32.xlu0 %v1434, 113
    %v2152 = vpop.permute.xlu0 %2151
    %2153 = vrot.lane.b32.xlu0 %v1435, 113
    %v2154 = vpop.permute.xlu0 %2153
    %2155 = vrot.lane.b32.xlu0 %v1436, 113
    %v2156 = vpop.permute.xlu0 %2155
    %v2157 = vsel %vm973, %v2154, %v2156
    %v2158 = vsel %vm973, %v2152, %v2154
    %v2159 = vsel %vm973, %v2150, %v2152
    %v2160 = vsel %vm973, %v2156, %v2150
    %v2161 = vmul.f32 %v2159, %v981
    %v2162 = vmul.f32 %v2158, %v985
    %v2163 = vmul.f32 %v2157, %v989
    %v2164 = vmul.f32 %v2160, %v993
    %v2165 = vpack.c.bf16 %v2161, %v2161
    %v2166 = vpack.c.bf16 %v2162, %v2162
    %v2167 = vpack.c.bf16 %v2163, %v2163
    %v2168 = vpack.c.bf16 %v2164, %v2164
    %v2170 = vsel %vm1486, %v1443, 0
    %v2173 = vsel %vm98, %v2165, 0
    %v2176 = vsel %vm98, %v2166, 0
    %v2179 = vsel %vm98, %v2167, 0
    %v2182 = vsel %vm98, %v2168, 0
    %2184 = vmatprep.subr.bf16.mxu0 0
    %2185 = vmatpush1.bf16.msra.mxu0 0
    %2186 = vmatprep.subr.bf16.mxu0 0
    %2187 = vmatpush1.bf16.msra.mxu0 0
    %2188 = vmatprep.subr.bf16.mxu0 0
    %2189 = vmatpush1.bf16.msra.mxu0 0
    %2190 = vmatprep.subr.bf16.mxu0 0
    %2191 = vmatpush1.bf16.msra.mxu0 0
    %2192 = vmatprep.subr.bf16.mxu0 0
    %2193 = vmatpush1.bf16.msra.mxu0 0
    %2194 = vmatprep.subr.bf16.mxu0 0
    %2195 = vmatpush1.bf16.msra.mxu0 0
    %2196 = vmatprep.subr.bf16.mxu0 0
    %2197 = vmatpush1.bf16.msra.mxu0 0
    %2198 = vmatprep.subr.bf16.mxu0 %v2176
    %2199 = vmatpush1.bf16.msra.mxu0 %v2173
    %2200 = vmatprep.subr.bf16.mxu0 0
    %2201 = vmatpush2.bf16.msra.mxu0 0
    %2202 = vmatprep.subr.bf16.mxu0 0
    %2203 = vmatpush2.bf16.msra.mxu0 0
    %2204 = vmatprep.subr.bf16.mxu0 0
    %2205 = vmatpush2.bf16.msra.mxu0 0
    %2206 = vmatprep.subr.bf16.mxu0 0
    %2207 = vmatpush2.bf16.msra.mxu0 0
    %2208 = vmatprep.subr.bf16.mxu0 0
    %2209 = vmatpush2.bf16.msra.mxu0 0
    %2210 = vmatprep.subr.bf16.mxu0 0
    %2211 = vmatpush2.bf16.msra.mxu0 0
    %2212 = vmatprep.subr.bf16.mxu0 0
    %2213 = vmatpush2.bf16.msra.mxu0 0
    %2214 = vmatprep.subr.bf16.mxu0 0
    %2215 = vmatpush2.bf16.msra.mxu0 0
    %2216 = vmatprep.mubr.bf16.mxu0 0
    %2217 = vmatmul.mubr.bf16.gmra.mxu0 %v2170
    %v2218 = vpop.f32.mrf.mxu0
    %v2219 = vadd.f32 0.0, %v2218
    %v2220 = vpop.f32.mrf.mxu0
    %v2221 = vadd.f32 0.0, %v2220
    %v2222 = vpop.f32.mrf.mxu0
    %v2223 = vpop.f32.mrf.mxu0
    %2224 = vdwg.mxu0
    %2225 = vmatprep.subr.bf16.mxu0 0
    %2226 = vmatpush1.bf16.msra.mxu0 0
    %2227 = vmatprep.subr.bf16.mxu0 0
    %2228 = vmatpush1.bf16.msra.mxu0 0
    %2229 = vmatprep.subr.bf16.mxu0 0
    %2230 = vmatpush1.bf16.msra.mxu0 0
    %2231 = vmatprep.subr.bf16.mxu0 0
    %2232 = vmatpush1.bf16.msra.mxu0 0
    %2233 = vmatprep.subr.bf16.mxu0 0
    %2234 = vmatpush1.bf16.msra.mxu0 0
    %2235 = vmatprep.subr.bf16.mxu0 0
    %2236 = vmatpush1.bf16.msra.mxu0 0
    %2237 = vmatprep.subr.bf16.mxu0 0
    %2238 = vmatpush1.bf16.msra.mxu0 0
    %2239 = vmatprep.subr.bf16.mxu0 %v2182
    %2240 = vmatpush1.bf16.msra.mxu0 %v2179
    %2241 = vmatprep.subr.bf16.mxu0 0
    %2242 = vmatpush2.bf16.msra.mxu0 0
    %2243 = vmatprep.subr.bf16.mxu0 0
    %2244 = vmatpush2.bf16.msra.mxu0 0
    %2245 = vmatprep.subr.bf16.mxu0 0
    %2246 = vmatpush2.bf16.msra.mxu0 0
    %2247 = vmatprep.subr.bf16.mxu0 0
    %2248 = vmatpush2.bf16.msra.mxu0 0
    %2249 = vmatprep.subr.bf16.mxu0 0
    %2250 = vmatpush2.bf16.msra.mxu0 0
    %2251 = vmatprep.subr.bf16.mxu0 0
    %2252 = vmatpush2.bf16.msra.mxu0 0
    %2253 = vmatprep.subr.bf16.mxu0 0
    %2254 = vmatpush2.bf16.msra.mxu0 0
    %2255 = vmatprep.subr.bf16.mxu0 0
    %2256 = vmatpush2.bf16.msra.mxu0 0
    %2257 = vmatprep.mubr.bf16.mxu0 0
    %2258 = vmatmul.mubr.bf16.gmra.mxu0 %v2170
    %v2259 = vpop.f32.mrf.mxu0
    %v2260 = vadd.f32 0.0, %v2259
    %v2261 = vpop.f32.mrf.mxu0
    %v2262 = vadd.f32 0.0, %v2261
    %v2263 = vpop.f32.mrf.mxu0
    %v2264 = vpop.f32.mrf.mxu0
    %2265 = vdwg.mxu0
    %v2266 = vadd.f32 %v2145, %v2219
    %v2267 = vadd.f32 %v2146, %v2221
    %v2268 = vadd.f32 %v2147, %v2260
    %v2269 = vadd.f32 %v2148, %v2262
    %2270 = vrot.lane.b32.xlu0 %v1433, 112
    %v2271 = vpop.permute.xlu0 %2270
    %2272 = vrot.lane.b32.xlu0 %v1434, 112
    %v2273 = vpop.permute.xlu0 %2272
    %2274 = vrot.lane.b32.xlu0 %v1435, 112
    %v2275 = vpop.permute.xlu0 %2274
    %2276 = vrot.lane.b32.xlu0 %v1436, 112
    %v2277 = vpop.permute.xlu0 %2276
    %v2278 = vsel %vm1111, %v2275, %v2277
    %v2279 = vsel %vm1111, %v2273, %v2275
    %v2280 = vsel %vm1111, %v2271, %v2273
    %v2281 = vsel %vm1111, %v2277, %v2271
    %v2282 = vmul.f32 %v2280, %v1119
    %v2283 = vmul.f32 %v2279, %v1123
    %v2284 = vmul.f32 %v2278, %v1127
    %v2285 = vmul.f32 %v2281, %v1131
    %v2286 = vpack.c.bf16 %v2282, %v2282
    %v2287 = vpack.c.bf16 %v2283, %v2283
    %v2288 = vpack.c.bf16 %v2284, %v2284
    %v2289 = vpack.c.bf16 %v2285, %v2285
    %v2291 = vsel %vm1486, %v1444, 0
    %v2294 = vsel %vm98, %v2286, 0
    %v2297 = vsel %vm98, %v2287, 0
    %v2300 = vsel %vm98, %v2288, 0
    %v2303 = vsel %vm98, %v2289, 0
    %2305 = vmatprep.subr.bf16.mxu0 0
    %2306 = vmatpush1.bf16.msra.mxu0 0
    %2307 = vmatprep.subr.bf16.mxu0 0
    %2308 = vmatpush1.bf16.msra.mxu0 0
    %2309 = vmatprep.subr.bf16.mxu0 0
    %2310 = vmatpush1.bf16.msra.mxu0 0
    %2311 = vmatprep.subr.bf16.mxu0 0
    %2312 = vmatpush1.bf16.msra.mxu0 0
    %2313 = vmatprep.subr.bf16.mxu0 0
    %2314 = vmatpush1.bf16.msra.mxu0 0
    %2315 = vmatprep.subr.bf16.mxu0 0
    %2316 = vmatpush1.bf16.msra.mxu0 0
    %2317 = vmatprep.subr.bf16.mxu0 0
    %2318 = vmatpush1.bf16.msra.mxu0 0
    %2319 = vmatprep.subr.bf16.mxu0 %v2297
    %2320 = vmatpush1.bf16.msra.mxu0 %v2294
    %2321 = vmatprep.subr.bf16.mxu0 0
    %2322 = vmatpush2.bf16.msra.mxu0 0
    %2323 = vmatprep.subr.bf16.mxu0 0
    %2324 = vmatpush2.bf16.msra.mxu0 0
    %2325 = vmatprep.subr.bf16.mxu0 0
    %2326 = vmatpush2.bf16.msra.mxu0 0
    %2327 = vmatprep.subr.bf16.mxu0 0
    %2328 = vmatpush2.bf16.msra.mxu0 0
    %2329 = vmatprep.subr.bf16.mxu0 0
    %2330 = vmatpush2.bf16.msra.mxu0 0
    %2331 = vmatprep.subr.bf16.mxu0 0
    %2332 = vmatpush2.bf16.msra.mxu0 0
    %2333 = vmatprep.subr.bf16.mxu0 0
    %2334 = vmatpush2.bf16.msra.mxu0 0
    %2335 = vmatprep.subr.bf16.mxu0 0
    %2336 = vmatpush2.bf16.msra.mxu0 0
    %2337 = vmatprep.mubr.bf16.mxu0 0
    %2338 = vmatmul.mubr.bf16.gmra.mxu0 %v2291
    %v2339 = vpop.f32.mrf.mxu0
    %v2340 = vadd.f32 0.0, %v2339
    %v2341 = vpop.f32.mrf.mxu0
    %v2342 = vadd.f32 0.0, %v2341
    %v2343 = vpop.f32.mrf.mxu0
    %v2344 = vpop.f32.mrf.mxu0
    %2345 = vdwg.mxu0
    %2346 = vmatprep.subr.bf16.mxu0 0
    %2347 = vmatpush1.bf16.msra.mxu0 0
    %2348 = vmatprep.subr.bf16.mxu0 0
    %2349 = vmatpush1.bf16.msra.mxu0 0
    %2350 = vmatprep.subr.bf16.mxu0 0
    %2351 = vmatpush1.bf16.msra.mxu0 0
    %2352 = vmatprep.subr.bf16.mxu0 0
    %2353 = vmatpush1.bf16.msra.mxu0 0
    %2354 = vmatprep.subr.bf16.mxu0 0
    %2355 = vmatpush1.bf16.msra.mxu0 0
    %2356 = vmatprep.subr.bf16.mxu0 0
    %2357 = vmatpush1.bf16.msra.mxu0 0
    %2358 = vmatprep.subr.bf16.mxu0 0
    %2359 = vmatpush1.bf16.msra.mxu0 0
    %2360 = vmatprep.subr.bf16.mxu0 %v2303
    %2361 = vmatpush1.bf16.msra.mxu0 %v2300
    %2362 = vmatprep.subr.bf16.mxu0 0
    %2363 = vmatpush2.bf16.msra.mxu0 0
    %2364 = vmatprep.subr.bf16.mxu0 0
    %2365 = vmatpush2.bf16.msra.mxu0 0
    %2366 = vmatprep.subr.bf16.mxu0 0
    %2367 = vmatpush2.bf16.msra.mxu0 0
    %2368 = vmatprep.subr.bf16.mxu0 0
    %2369 = vmatpush2.bf16.msra.mxu0 0
    %2370 = vmatprep.subr.bf16.mxu0 0
    %2371 = vmatpush2.bf16.msra.mxu0 0
    %2372 = vmatprep.subr.bf16.mxu0 0
    %2373 = vmatpush2.bf16.msra.mxu0 0
    %2374 = vmatprep.subr.bf16.mxu0 0
    %2375 = vmatpush2.bf16.msra.mxu0 0
    %2376 = vmatprep.subr.bf16.mxu0 0
    %2377 = vmatpush2.bf16.msra.mxu0 0
    %2378 = vmatprep.mubr.bf16.mxu0 0
    %2379 = vmatmul.mubr.bf16.gmra.mxu0 %v2291
    %v2380 = vpop.f32.mrf.mxu0
    %v2381 = vadd.f32 0.0, %v2380
    %v2382 = vpop.f32.mrf.mxu0
    %v2383 = vadd.f32 0.0, %v2382
    %v2384 = vpop.f32.mrf.mxu0
    %v2385 = vpop.f32.mrf.mxu0
    %2386 = vdwg.mxu0
    %v2387 = vadd.f32 %v2266, %v2340
    %v2388 = vadd.f32 %v2267, %v2342
    %v2389 = vadd.f32 %v2268, %v2381
    %v2390 = vadd.f32 %v2269, %v2383
    %2391 = vrot.lane.b32.xlu0 %v1433, 111
    %v2392 = vpop.permute.xlu0 %2391
    %2393 = vrot.lane.b32.xlu0 %v1434, 111
    %v2394 = vpop.permute.xlu0 %2393
    %2395 = vrot.lane.b32.xlu0 %v1435, 111
    %v2396 = vpop.permute.xlu0 %2395
    %2397 = vrot.lane.b32.xlu0 %v1436, 111
    %v2398 = vpop.permute.xlu0 %2397
    %v2399 = vsel %vm1249, %v2396, %v2398
    %v2400 = vsel %vm1249, %v2394, %v2396
    %v2401 = vsel %vm1249, %v2392, %v2394
    %v2402 = vsel %vm1249, %v2398, %v2392
    %v2403 = vmul.f32 %v2401, %v1257
    %v2404 = vmul.f32 %v2400, %v1261
    %v2405 = vmul.f32 %v2399, %v1265
    %v2406 = vmul.f32 %v2402, %v1269
    %v2407 = vpack.c.bf16 %v2403, %v2403
    %v2408 = vpack.c.bf16 %v2404, %v2404
    %v2409 = vpack.c.bf16 %v2405, %v2405
    %v2410 = vpack.c.bf16 %v2406, %v2406
    %v2412 = vsel %vm1486, %v1445, 0
    %v2415 = vsel %vm98, %v2407, 0
    %v2418 = vsel %vm98, %v2408, 0
    %v2421 = vsel %vm98, %v2409, 0
    %v2424 = vsel %vm98, %v2410, 0
    %2426 = vmatprep.subr.bf16.mxu0 0
    %2427 = vmatpush1.bf16.msra.mxu0 0
    %2428 = vmatprep.subr.bf16.mxu0 0
    %2429 = vmatpush1.bf16.msra.mxu0 0
    %2430 = vmatprep.subr.bf16.mxu0 0
    %2431 = vmatpush1.bf16.msra.mxu0 0
    %2432 = vmatprep.subr.bf16.mxu0 0
    %2433 = vmatpush1.bf16.msra.mxu0 0
    %2434 = vmatprep.subr.bf16.mxu0 0
    %2435 = vmatpush1.bf16.msra.mxu0 0
    %2436 = vmatprep.subr.bf16.mxu0 0
    %2437 = vmatpush1.bf16.msra.mxu0 0
    %2438 = vmatprep.subr.bf16.mxu0 0
    %2439 = vmatpush1.bf16.msra.mxu0 0
    %2440 = vmatprep.subr.bf16.mxu0 %v2418
    %2441 = vmatpush1.bf16.msra.mxu0 %v2415
    %2442 = vmatprep.subr.bf16.mxu0 0
    %2443 = vmatpush2.bf16.msra.mxu0 0
    %2444 = vmatprep.subr.bf16.mxu0 0
    %2445 = vmatpush2.bf16.msra.mxu0 0
    %2446 = vmatprep.subr.bf16.mxu0 0
    %2447 = vmatpush2.bf16.msra.mxu0 0
    %2448 = vmatprep.subr.bf16.mxu0 0
    %2449 = vmatpush2.bf16.msra.mxu0 0
    %2450 = vmatprep.subr.bf16.mxu0 0
    %2451 = vmatpush2.bf16.msra.mxu0 0
    %2452 = vmatprep.subr.bf16.mxu0 0
    %2453 = vmatpush2.bf16.msra.mxu0 0
    %2454 = vmatprep.subr.bf16.mxu0 0
    %2455 = vmatpush2.bf16.msra.mxu0 0
    %2456 = vmatprep.subr.bf16.mxu0 0
    %2457 = vmatpush2.bf16.msra.mxu0 0
    %2458 = vmatprep.mubr.bf16.mxu0 0
    %2459 = vmatmul.mubr.bf16.gmra.mxu0 %v2412
    %v2460 = vpop.f32.mrf.mxu0
    %v2461 = vadd.f32 0.0, %v2460
    %v2462 = vpop.f32.mrf.mxu0
    %v2463 = vadd.f32 0.0, %v2462
    %v2464 = vpop.f32.mrf.mxu0
    %v2465 = vpop.f32.mrf.mxu0
    %2466 = vdwg.mxu0
    %2467 = vmatprep.subr.bf16.mxu0 0
    %2468 = vmatpush1.bf16.msra.mxu0 0
    %2469 = vmatprep.subr.bf16.mxu0 0
    %2470 = vmatpush1.bf16.msra.mxu0 0
    %2471 = vmatprep.subr.bf16.mxu0 0
    %2472 = vmatpush1.bf16.msra.mxu0 0
    %2473 = vmatprep.subr.bf16.mxu0 0
    %2474 = vmatpush1.bf16.msra.mxu0 0
    %2475 = vmatprep.subr.bf16.mxu0 0
    %2476 = vmatpush1.bf16.msra.mxu0 0
    %2477 = vmatprep.subr.bf16.mxu0 0
    %2478 = vmatpush1.bf16.msra.mxu0 0
    %2479 = vmatprep.subr.bf16.mxu0 0
    %2480 = vmatpush1.bf16.msra.mxu0 0
    %2481 = vmatprep.subr.bf16.mxu0 %v2424
    %2482 = vmatpush1.bf16.msra.mxu0 %v2421
    %2483 = vmatprep.subr.bf16.mxu0 0
    %2484 = vmatpush2.bf16.msra.mxu0 0
    %2485 = vmatprep.subr.bf16.mxu0 0
    %2486 = vmatpush2.bf16.msra.mxu0 0
    %2487 = vmatprep.subr.bf16.mxu0 0
    %2488 = vmatpush2.bf16.msra.mxu0 0
    %2489 = vmatprep.subr.bf16.mxu0 0
    %2490 = vmatpush2.bf16.msra.mxu0 0
    %2491 = vmatprep.subr.bf16.mxu0 0
    %2492 = vmatpush2.bf16.msra.mxu0 0
    %2493 = vmatprep.subr.bf16.mxu0 0
    %2494 = vmatpush2.bf16.msra.mxu0 0
    %2495 = vmatprep.subr.bf16.mxu0 0
    %2496 = vmatpush2.bf16.msra.mxu0 0
    %2497 = vmatprep.subr.bf16.mxu0 0
    %2498 = vmatpush2.bf16.msra.mxu0 0
    %2499 = vmatprep.mubr.bf16.mxu0 0
    %2500 = vmatmul.mubr.bf16.gmra.mxu0 %v2412
    %v2501 = vpop.f32.mrf.mxu0
    %v2502 = vadd.f32 0.0, %v2501
    %v2503 = vpop.f32.mrf.mxu0
    %v2504 = vadd.f32 0.0, %v2503
    %v2505 = vpop.f32.mrf.mxu0
    %v2506 = vpop.f32.mrf.mxu0
    %2507 = vdwg.mxu0
    %v2508 = vadd.f32 %v2387, %v2461
    %v2509 = vadd.f32 %v2388, %v2463
    %v2510 = vadd.f32 %v2389, %v2502
    %v2511 = vadd.f32 %v2390, %v2504
    %v2512 = vld [vmem:[%s9] sm:$0xff]
    %2514 = vset.pattern.permute.xlu0 0
    %2515 = vperm.xlu0 %2514, %v2512
    %v2516 = vpop.permute.xlu0 %2515
    %v2518 = vadd.f32 %v2508, %v2516
    %v2519 = vadd.f32 %v2509, %v2516
    %v2520 = vadd.f32 %v2510, %v2516
    %v2521 = vadd.f32 %v2511, %v2516
    %v2522 = vld [vmem:[%s10] sm:$0xf]
    %v2523 = vpack.c.bf16 %v78, %v78
    %v2524 = vpack.c.bf16 %v94, %v94
    %v2525 = vpack.c.bf16 %v79, %v79
    %v2526 = vpack.c.bf16 %v95, %v95
    %v2527 = vld [vmem:[%s11] sm:$0xff]
    %2529 = vset.pattern.permute.xlu0 0
    %2530 = vperm.xlu0 %2529, %v2527
    %v2531 = vpop.permute.xlu0 %2530
    %v2534 = vsel %vm250, %v2522, 0
    %v2537 = vsel %vm254, %v2523, 0
    %v2540 = vsel %vm254, %v2524, 0
    %v2543 = vsel %vm254, %v2525, 0
    %v2546 = vsel %vm254, %v2526, 0
    %2548 = vmatprep.subr.bf16.mxu0 0
    %2549 = vmatpush1.bf16.msra.mxu0 0
    %2550 = vmatprep.subr.bf16.mxu0 0
    %2551 = vmatpush1.bf16.msra.mxu0 0
    %2552 = vmatprep.subr.bf16.mxu0 0
    %2553 = vmatpush1.bf16.msra.mxu0 0
    %2554 = vmatprep.subr.bf16.mxu0 0
    %2555 = vmatpush1.bf16.msra.mxu0 0
    %2556 = vmatprep.subr.bf16.mxu0 0
    %2557 = vmatpush1.bf16.msra.mxu0 0
    %2558 = vmatprep.subr.bf16.mxu0 0
    %2559 = vmatpush1.bf16.msra.mxu0 0
    %2560 = vmatprep.subr.bf16.mxu0 0
    %2561 = vmatpush1.bf16.msra.mxu0 0
    %2562 = vmatprep.subr.bf16.mxu0 %v2540
    %2563 = vmatpush1.bf16.msra.mxu0 %v2537
    %2564 = vmatprep.subr.bf16.mxu0 0
    %2565 = vmatpush2.bf16.msra.mxu0 0
    %2566 = vmatprep.subr.bf16.mxu0 0
    %2567 = vmatpush2.bf16.msra.mxu0 0
    %2568 = vmatprep.subr.bf16.mxu0 0
    %2569 = vmatpush2.bf16.msra.mxu0 0
    %2570 = vmatprep.subr.bf16.mxu0 0
    %2571 = vmatpush2.bf16.msra.mxu0 0
    %2572 = vmatprep.subr.bf16.mxu0 0
    %2573 = vmatpush2.bf16.msra.mxu0 0
    %2574 = vmatprep.subr.bf16.mxu0 0
    %2575 = vmatpush2.bf16.msra.mxu0 0
    %2576 = vmatprep.subr.bf16.mxu0 0
    %2577 = vmatpush2.bf16.msra.mxu0 0
    %2578 = vmatprep.subr.bf16.mxu0 0
    %2579 = vmatpush2.bf16.msra.mxu0 0
    %2580 = vmatprep.mubr.bf16.mxu0 0
    %2581 = vmatmul.mubr.bf16.gmra.mxu0 %v2534
    %v2582 = vpop.f32.mrf.mxu0
    %v2583 = vadd.f32 %v2531, %v2582
    %v2584 = vpop.f32.mrf.mxu0
    %v2585 = vadd.f32 %v2531, %v2584
    %v2586 = vpop.f32.mrf.mxu0
    %v2587 = vpop.f32.mrf.mxu0
    %2588 = vdwg.mxu0
    %2589 = vmatprep.subr.bf16.mxu0 0
    %2590 = vmatpush1.bf16.msra.mxu0 0
    %2591 = vmatprep.subr.bf16.mxu0 0
    %2592 = vmatpush1.bf16.msra.mxu0 0
    %2593 = vmatprep.subr.bf16.mxu0 0
    %2594 = vmatpush1.bf16.msra.mxu0 0
    %2595 = vmatprep.subr.bf16.mxu0 0
    %2596 = vmatpush1.bf16.msra.mxu0 0
    %2597 = vmatprep.subr.bf16.mxu0 0
    %2598 = vmatpush1.bf16.msra.mxu0 0
    %2599 = vmatprep.subr.bf16.mxu0 0
    %2600 = vmatpush1.bf16.msra.mxu0 0
    %2601 = vmatprep.subr.bf16.mxu0 0
    %2602 = vmatpush1.bf16.msra.mxu0 0
    %2603 = vmatprep.subr.bf16.mxu0 %v2546
    %2604 = vmatpush1.bf16.msra.mxu0 %v2543
    %2605 = vmatprep.subr.bf16.mxu0 0
    %2606 = vmatpush2.bf16.msra.mxu0 0
    %2607 = vmatprep.subr.bf16.mxu0 0
    %2608 = vmatpush2.bf16.msra.mxu0 0
    %2609 = vmatprep.subr.bf16.mxu0 0
    %2610 = vmatpush2.bf16.msra.mxu0 0
    %2611 = vmatprep.subr.bf16.mxu0 0
    %2612 = vmatpush2.bf16.msra.mxu0 0
    %2613 = vmatprep.subr.bf16.mxu0 0
    %2614 = vmatpush2.bf16.msra.mxu0 0
    %2615 = vmatprep.subr.bf16.mxu0 0
    %2616 = vmatpush2.bf16.msra.mxu0 0
    %2617 = vmatprep.subr.bf16.mxu0 0
    %2618 = vmatpush2.bf16.msra.mxu0 0
    %2619 = vmatprep.subr.bf16.mxu0 0
    %2620 = vmatpush2.bf16.msra.mxu0 0
    %2621 = vmatprep.mubr.bf16.mxu0 0
    %2622 = vmatmul.mubr.bf16.gmra.mxu0 %v2534
    %v2623 = vpop.f32.mrf.mxu0
    %v2624 = vadd.f32 %v2531, %v2623
    %v2625 = vpop.f32.mrf.mxu0
    %v2626 = vadd.f32 %v2531, %v2625
    %v2627 = vpop.f32.mrf.mxu0
    %v2628 = vpop.f32.mrf.mxu0
    %2629 = vdwg.mxu0
    %v2630 = vadd.f32 %v2583, %v2518
    %v2631 = vadd.f32 %v2585, %v2519
    %v2632 = vadd.f32 %v2624, %v2520
    %v2633 = vadd.f32 %v2626, %v2521
    %2634 = vst [vmem:[#allocation8] sm:$0xff] %v2630
    %2635 = vst [vmem:[#allocation8 + $0x8] sm:$0xff] %v2631
    %2636 = vst [vmem:[#allocation8 + $0x10] sm:$0xff] %v2632
    %2637 = vst [vmem:[#allocation8 + $0x18] sm:$0xff] %v2633
    // Predicated region
    $region62: #{tpu_custom_call.1} parent=1 // pred_check
      _
    $region63: #{tpu_custom_call.1} parent=1 // pred_check_branch
      %2639 = sbr.rel (0) target = $region65
    $region64: #{tpu_custom_call.1} parent=1 // pred_region
      %s2641 = ssub.s32 512, 512
      %2642 = vsyncadd [#allocation4], %s2641
      %s2644 = sshll.u32 [#allocation8], 4
      %s2645 = int_to_ptr.vmem [resolvable:$true] %s2644
      %2647 = dma.vmem_to_hbm [thread:$0]  %s2645, 512, %s12, [#allocation4]
    $region65: #{tpu_custom_call.1} parent=1 // pred_fallthru
      _
    // Predicated region
    $region66: #{tpu_custom_call.1} parent=1 // pred_check
      _
    $region67: #{tpu_custom_call.1} parent=1 // pred_check_branch
      %2649 = sbr.rel (0) target = $region69
    $region68: #{tpu_custom_call.1} parent=1 // pred_region
      %2650 = dma.done [#allocation4], 512
    $region69: #{tpu_custom_call.1} parent=1 // pred_fallthru
      _
    %2651 = vsyncpa [#allocation3], 1
    %2652 = vsyncpa [#allocation6], 1
    %2653 = vsyncpa [#allocation4], 1

</llo_original>
